<compile_context>
chip_gen: v7x
topology: tpu7x:2x2x1
jax: 0.10.0
libtpu: 0.0.40
codegen_flags: <defaults>
</compile_context>

<pallas_src>
import jax
import jax.numpy as jnp
from jax.experimental import pallas as pl
from jax.experimental.pallas import tpu as pltpu


def _embed_gather_kernel(ids_ref, table_hbm, out_ref, buf, sems):
    # ids_ref   : SMEM (n_pad,) int32     scalar-prefetched, pre-clamped token ids
    # table_hbm : HBM  (V, D)             raw ref (memory_space=pl.ANY), no auto-DMA
    # out_ref   : VMEM (ROWS, D)          output tile for block t
    # buf       : VMEM (2, ROWS, D)       double-buffered gather staging (persists
    #                                     across grid steps)
    # sems      : DMA semaphores (2, ROWS)
    t = pl.program_id(0)
    nblk = pl.num_programs(0)
    rows = out_ref.shape[0]
    cur = t & 1
    nxt = 1 - cur

    def row_copy(block_idx, slot, r):
        tok = ids_ref[block_idx * rows + r]
        return pltpu.make_async_copy(
            table_hbm.at[pl.ds(tok, 1)],
            buf.at[slot, pl.ds(r, 1)],
            sems.at[slot, r],
        )

    # Prime the pipeline: on the first grid step, start block 0's gathers
    # into slot 0.
    @pl.when(t == 0)
    def _():
        for r in range(rows):  # ROWS is small & static (<= 64) -> cheap unroll
            row_copy(0, 0, r).start()

    # Cross-block prefetch: start block t+1's gathers into the other slot
    # BEFORE waiting on block t, so their latency hides behind this block's
    # waits, dense store and output writeback.
    @pl.when(t + 1 < nblk)
    def _():
        for r in range(rows):
            row_copy(t + 1, nxt, r).start()

    # Wait for the current block.  Descriptors are reconstructed exactly
    # (same src row / dst slice / semaphore) from the ids still in SMEM.
    for r in range(rows):
        row_copy(t, cur, r).wait()

    # Single sublane/lane-dense (ROWS, D) store (unmasked vst).
    out_ref[...] = buf[cur]


def _choose_rows_per_block(n, cap=64):
    """Largest multiple of 8 (<= cap) dividing n -> no padding; else padded fallback."""
    best = 0
    for r in range(8, min(cap, n) + 1, 8):
        if n % r == 0:
            best = r
    if best:
        return best, n
    rows = min(cap, max(8, ((n + 7) // 8) * 8))
    n_pad = ((n + rows - 1) // rows) * rows
    return rows, n_pad


def embeddings_forward(input_ids, word_table, pos_table, ln_gamma, ln_beta,
                       *, rows_per_block=None):
    """Faithful forward of `Embeddings`: returns word_embeddings(input_ids)."""
    del pos_table, ln_gamma, ln_beta  # dead-code path in the reference forward
    B, S = input_ids.shape
    V, D = word_table.shape
    n = B * S

    if rows_per_block is None:
        rows_per_block, n_pad = _choose_rows_per_block(n)
    else:
        n_pad = ((n + rows_per_block - 1) // rows_per_block) * rows_per_block
    num_blocks = n_pad // rows_per_block

    # Guard the whole-array scalar prefetch: 1D SMEM arrays pad to the next
    # power-of-two bytes, so keep the id array comfortably inside SMEM.
    # TODO(synk): for very large B*S, switch to per-block SMEM-tiled ids (or
    # chunk the call) instead of whole-array scalar prefetch.
    if n_pad > (1 << 16):
        raise ValueError(
            f"B*S = {n} too large for whole-array SMEM id prefetch; chunk the "
            "call into <= 65536-token pieces.")

    # Clamp ids in the (cheap) XLA wrapper so the in-kernel DMA source index is
    # always in range.  (PyTorch would raise on out-of-range ids instead.)
    flat_ids = jnp.clip(input_ids.reshape(-1).astype(jnp.int32), 0, V - 1)
    if n_pad != n:
        # Pad ids gather row 0 and are sliced off below (fallback path only).
        flat_ids = jnp.pad(flat_ids, (0, n_pad - n))

    out_flat = pl.pallas_call(
        _embed_gather_kernel,
        out_shape=jax.ShapeDtypeStruct((n_pad, D), word_table.dtype),
        grid_spec=pltpu.PrefetchScalarGridSpec(
            num_scalar_prefetch=1,                   # flat_ids -> SMEM
            grid=(num_blocks,),
            in_specs=[
                pl.BlockSpec(memory_space=pl.ANY),   # table stays in HBM
            ],
            out_specs=pl.BlockSpec((rows_per_block, D), lambda t, ids: (t, 0)),
            scratch_shapes=[
                pltpu.VMEM((2, rows_per_block, D), word_table.dtype),
                pltpu.SemaphoreType.DMA((2, rows_per_block)),
            ],
        ),
        compiler_params=pltpu.CompilerParams(
            # The cross-block prefetch carries state (buf/sems) across grid
            # steps, so this axis must stay sequential; "parallel" could split
            # it across v7x's two TensorCores and orphan the primed DMAs.
            dimension_semantics=("arbitrary",),
        ),
    )(flat_ids, word_table)

    if n_pad != n:
        out_flat = out_flat[:n]
    return out_flat.reshape(B, S, D)


def init_params(key, vocab_size, dim, max_position_embeddings):
    """Deterministic synthetic parameters matching the module's __init__ shapes."""
    k_word, k_pos = jax.random.split(key)
    word_table = 0.02 * jax.random.normal(k_word, (vocab_size, dim), jnp.float32)
    pos_table = 0.02 * jax.random.normal(k_pos, (max_position_embeddings, dim),
                                         jnp.float32)
    ln_gamma = jnp.ones((dim,), jnp.float32)
    ln_beta = jnp.zeros((dim,), jnp.float32)
    return word_table, pos_table, ln_gamma, ln_beta


if __name__ == "__main__":
    # Small shapes consistent with the module's forward.
    VOCAB = 512
    DIM = 256            # last dim multiple of 128 -> lane-dense stores
    MAX_POS = 64
    B, S = 2, 8

    key = jax.random.PRNGKey(0)
    k_params, k_ids = jax.random.split(key)

    word_table, pos_table, ln_gamma, ln_beta = init_params(
        k_params, VOCAB, DIM, MAX_POS)
    input_ids = jax.random.randint(k_ids, (B, S), 0, VOCAB, dtype=jnp.int32)

    out = embeddings_forward(input_ids, word_table, pos_table, ln_gamma, ln_beta)
    out = jax.block_until_ready(out)

    # Pure-JAX reference (the module returns the raw word-embedding lookup).
    ref = word_table[input_ids]
    assert out.shape == (B, S, DIM), out.shape
    assert jnp.array_equal(out, ref), "mismatch vs reference gather"

    print("KERNEL_OK")
</pallas_src>

<mosaic_0001>
module attributes {stable_mosaic.version = 11 : i64} {
  func.func @_embed_gather_kernel(%arg0: i32, %arg1: memref<16xi32, #tpu.memory_space<smem>>, %arg2: memref<512x256xf32, #tpu.memory_space<any>>, %arg3: memref<16x256xf32, #tpu.memory_space<vmem>>, %arg4: memref<2x16x256xf32, #tpu.memory_space<vmem>>, %arg5: memref<2x16x!tpu.dma_semaphore, #tpu.memory_space<semaphore_mem>>) attributes {dimension_semantics = [#tpu.dimension_semantics<arbitrary>], iteration_bounds = array<i64: 1>, scalar_prefetch = 1 : i64, scratch_operands = 2 : i64, tpu.core_type = #tpu.core_type<tc>, window_params = [{}, {transform_indices = @transform_1, window_bounds = array<i64: 16, 256>}]} {
    %c1_i32 = arith.constant 1 : i32
    %0 = arith.andi %arg0, %c1_i32 : i32
    %c1_i32_0 = arith.constant 1 : i32
    %1 = arith.subi %c1_i32_0, %0 : i32
    %c0_i32 = arith.constant 0 : i32
    %2 = arith.cmpi eq, %arg0, %c0_i32 : i32
    %3 = arith.extui %2 : i1 to i32
    %c0_i32_1 = arith.constant 0 : i32
    %4 = arith.cmpi ne, %3, %c0_i32_1 : i32
    scf.if %4 {
      %c0_89 = arith.constant 0 : index
      %157 = memref.load %arg1[%c0_89] : memref<16xi32, #tpu.memory_space<smem>>
      %c0_i32_90 = arith.constant 0 : i32
      %c0_i32_91 = arith.constant 0 : i32
      %c0_i32_92 = arith.constant 0 : i32
      %c0_i32_93 = arith.constant 0 : i32
      %158 = tpu.memref_slice %arg2[%157, %c0_i32_93] : memref<512x256xf32, #tpu.memory_space<any>> -> memref<1x256xf32, #tpu.memory_space<any>>
      %c0_i32_94 = arith.constant 0 : i32
      %c0_i32_95 = arith.constant 0 : i32
      %159 = tpu.memref_slice %arg4[%c0_i32_90, %c0_i32_94, %c0_i32_95] : memref<2x16x256xf32, #tpu.memory_space<vmem>> -> memref<1x1x256xf32, #tpu.memory_space<vmem>>
      %160 = tpu.memref_squeeze %159 : memref<1x1x256xf32, #tpu.memory_space<vmem>> -> memref<1x256xf32, #tpu.memory_space<vmem>>
      %161 = tpu.memref_slice %arg5[%c0_i32_91, %c0_i32_92] : memref<2x16x!tpu.dma_semaphore, #tpu.memory_space<semaphore_mem>> -> memref<1x1x!tpu.dma_semaphore, #tpu.memory_space<semaphore_mem>>
      %162 = tpu.memref_squeeze %161 : memref<1x1x!tpu.dma_semaphore, #tpu.memory_space<semaphore_mem>> -> memref<!tpu.dma_semaphore, #tpu.memory_space<semaphore_mem>>
      tpu.enqueue_dma source(%158 : memref<1x256xf32, #tpu.memory_space<any>>) target(%160 : memref<1x256xf32, #tpu.memory_space<vmem>>) target_semaphore(%162 : memref<!tpu.dma_semaphore, #tpu.memory_space<semaphore_mem>>)
      %c1 = arith.constant 1 : index
      %163 = memref.load %arg1[%c1] : memref<16xi32, #tpu.memory_space<smem>>
      %c0_i32_96 = arith.constant 0 : i32
      %c0_i32_97 = arith.constant 0 : i32
      %c1_i32_98 = arith.constant 1 : i32
      %c0_i32_99 = arith.constant 0 : i32
      %164 = tpu.memref_slice %arg2[%163, %c0_i32_99] : memref<512x256xf32, #tpu.memory_space<any>> -> memref<1x256xf32, #tpu.memory_space<any>>
      %c1_i32_100 = arith.constant 1 : i32
      %c0_i32_101 = arith.constant 0 : i32
      %165 = tpu.memref_slice %arg4[%c0_i32_96, %c1_i32_100, %c0_i32_101] : memref<2x16x256xf32, #tpu.memory_space<vmem>> -> memref<1x1x256xf32, #tpu.memory_space<vmem>>
      %166 = tpu.memref_squeeze %165 : memref<1x1x256xf32, #tpu.memory_space<vmem>> -> memref<1x256xf32, #tpu.memory_space<vmem>>
      %167 = tpu.memref_slice %arg5[%c0_i32_97, %c1_i32_98] : memref<2x16x!tpu.dma_semaphore, #tpu.memory_space<semaphore_mem>> -> memref<1x1x!tpu.dma_semaphore, #tpu.memory_space<semaphore_mem>>
      %168 = tpu.memref_squeeze %167 : memref<1x1x!tpu.dma_semaphore, #tpu.memory_space<semaphore_mem>> -> memref<!tpu.dma_semaphore, #tpu.memory_space<semaphore_mem>>
      tpu.enqueue_dma source(%164 : memref<1x256xf32, #tpu.memory_space<any>>) target(%166 : memref<1x256xf32, #tpu.memory_space<vmem>>) target_semaphore(%168 : memref<!tpu.dma_semaphore, #tpu.memory_space<semaphore_mem>>)
      %c2 = arith.constant 2 : index
      %169 = memref.load %arg1[%c2] : memref<16xi32, #tpu.memory_space<smem>>
      %c0_i32_102 = arith.constant 0 : i32
      %c0_i32_103 = arith.constant 0 : i32
      %c2_i32_104 = arith.constant 2 : i32
      %c0_i32_105 = arith.constant 0 : i32
      %170 = tpu.memref_slice %arg2[%169, %c0_i32_105] : memref<512x256xf32, #tpu.memory_space<any>> -> memref<1x256xf32, #tpu.memory_space<any>>
      %c2_i32_106 = arith.constant 2 : i32
      %c0_i32_107 = arith.constant 0 : i32
      %171 = tpu.memref_slice %arg4[%c0_i32_102, %c2_i32_106, %c0_i32_107] : memref<2x16x256xf32, #tpu.memory_space<vmem>> -> memref<1x1x256xf32, #tpu.memory_space<vmem>>
      %172 = tpu.memref_squeeze %171 : memref<1x1x256xf32, #tpu.memory_space<vmem>> -> memref<1x256xf32, #tpu.memory_space<vmem>>
      %173 = tpu.memref_slice %arg5[%c0_i32_103, %c2_i32_104] : memref<2x16x!tpu.dma_semaphore, #tpu.memory_space<semaphore_mem>> -> memref<1x1x!tpu.dma_semaphore, #tpu.memory_space<semaphore_mem>>
      %174 = tpu.memref_squeeze %173 : memref<1x1x!tpu.dma_semaphore, #tpu.memory_space<semaphore_mem>> -> memref<!tpu.dma_semaphore, #tpu.memory_space<semaphore_mem>>
      tpu.enqueue_dma source(%170 : memref<1x256xf32, #tpu.memory_space<any>>) target(%172 : memref<1x256xf32, #tpu.memory_space<vmem>>) target_semaphore(%174 : memref<!tpu.dma_semaphore, #tpu.memory_space<semaphore_mem>>)
      %c3 = arith.constant 3 : index
      %175 = memref.load %arg1[%c3] : memref<16xi32, #tpu.memory_space<smem>>
      %c0_i32_108 = arith.constant 0 : i32
      %c0_i32_109 = arith.constant 0 : i32
      %c3_i32_110 = arith.constant 3 : i32
      %c0_i32_111 = arith.constant 0 : i32
      %176 = tpu.memref_slice %arg2[%175, %c0_i32_111] : memref<512x256xf32, #tpu.memory_space<any>> -> memref<1x256xf32, #tpu.memory_space<any>>
      %c3_i32_112 = arith.constant 3 : i32
      %c0_i32_113 = arith.constant 0 : i32
      %177 = tpu.memref_slice %arg4[%c0_i32_108, %c3_i32_112, %c0_i32_113] : memref<2x16x256xf32, #tpu.memory_space<vmem>> -> memref<1x1x256xf32, #tpu.memory_space<vmem>>
      %178 = tpu.memref_squeeze %177 : memref<1x1x256xf32, #tpu.memory_space<vmem>> -> memref<1x256xf32, #tpu.memory_space<vmem>>
      %179 = tpu.memref_slice %arg5[%c0_i32_109, %c3_i32_110] : memref<2x16x!tpu.dma_semaphore, #tpu.memory_space<semaphore_mem>> -> memref<1x1x!tpu.dma_semaphore, #tpu.memory_space<semaphore_mem>>
      %180 = tpu.memref_squeeze %179 : memref<1x1x!tpu.dma_semaphore, #tpu.memory_space<semaphore_mem>> -> memref<!tpu.dma_semaphore, #tpu.memory_space<semaphore_mem>>
      tpu.enqueue_dma source(%176 : memref<1x256xf32, #tpu.memory_space<any>>) target(%178 : memref<1x256xf32, #tpu.memory_space<vmem>>) target_semaphore(%180 : memref<!tpu.dma_semaphore, #tpu.memory_space<semaphore_mem>>)
      %c4 = arith.constant 4 : index
      %181 = memref.load %arg1[%c4] : memref<16xi32, #tpu.memory_space<smem>>
      %c0_i32_114 = arith.constant 0 : i32
      %c0_i32_115 = arith.constant 0 : i32
      %c4_i32_116 = arith.constant 4 : i32
      %c0_i32_117 = arith.constant 0 : i32
      %182 = tpu.memref_slice %arg2[%181, %c0_i32_117] : memref<512x256xf32, #tpu.memory_space<any>> -> memref<1x256xf32, #tpu.memory_space<any>>
      %c4_i32_118 = arith.constant 4 : i32
      %c0_i32_119 = arith.constant 0 : i32
      %183 = tpu.memref_slice %arg4[%c0_i32_114, %c4_i32_118, %c0_i32_119] : memref<2x16x256xf32, #tpu.memory_space<vmem>> -> memref<1x1x256xf32, #tpu.memory_space<vmem>>
      %184 = tpu.memref_squeeze %183 : memref<1x1x256xf32, #tpu.memory_space<vmem>> -> memref<1x256xf32, #tpu.memory_space<vmem>>
      %185 = tpu.memref_slice %arg5[%c0_i32_115, %c4_i32_116] : memref<2x16x!tpu.dma_semaphore, #tpu.memory_space<semaphore_mem>> -> memref<1x1x!tpu.dma_semaphore, #tpu.memory_space<semaphore_mem>>
      %186 = tpu.memref_squeeze %185 : memref<1x1x!tpu.dma_semaphore, #tpu.memory_space<semaphore_mem>> -> memref<!tpu.dma_semaphore, #tpu.memory_space<semaphore_mem>>
      tpu.enqueue_dma source(%182 : memref<1x256xf32, #tpu.memory_space<any>>) target(%184 : memref<1x256xf32, #tpu.memory_space<vmem>>) target_semaphore(%186 : memref<!tpu.dma_semaphore, #tpu.memory_space<semaphore_mem>>)
      %c5 = arith.constant 5 : index
      %187 = memref.load %arg1[%c5] : memref<16xi32, #tpu.memory_space<smem>>
      %c0_i32_120 = arith.constant 0 : i32
      %c0_i32_121 = arith.constant 0 : i32
      %c5_i32_122 = arith.constant 5 : i32
      %c0_i32_123 = arith.constant 0 : i32
      %188 = tpu.memref_slice %arg2[%187, %c0_i32_123] : memref<512x256xf32, #tpu.memory_space<any>> -> memref<1x256xf32, #tpu.memory_space<any>>
      %c5_i32_124 = arith.constant 5 : i32
      %c0_i32_125 = arith.constant 0 : i32
      %189 = tpu.memref_slice %arg4[%c0_i32_120, %c5_i32_124, %c0_i32_125] : memref<2x16x256xf32, #tpu.memory_space<vmem>> -> memref<1x1x256xf32, #tpu.memory_space<vmem>>
      %190 = tpu.memref_squeeze %189 : memref<1x1x256xf32, #tpu.memory_space<vmem>> -> memref<1x256xf32, #tpu.memory_space<vmem>>
      %191 = tpu.memref_slice %arg5[%c0_i32_121, %c5_i32_122] : memref<2x16x!tpu.dma_semaphore, #tpu.memory_space<semaphore_mem>> -> memref<1x1x!tpu.dma_semaphore, #tpu.memory_space<semaphore_mem>>
      %192 = tpu.memref_squeeze %191 : memref<1x1x!tpu.dma_semaphore, #tpu.memory_space<semaphore_mem>> -> memref<!tpu.dma_semaphore, #tpu.memory_space<semaphore_mem>>
      tpu.enqueue_dma source(%188 : memref<1x256xf32, #tpu.memory_space<any>>) target(%190 : memref<1x256xf32, #tpu.memory_space<vmem>>) target_semaphore(%192 : memref<!tpu.dma_semaphore, #tpu.memory_space<semaphore_mem>>)
      %c6 = arith.constant 6 : index
      %193 = memref.load %arg1[%c6] : memref<16xi32, #tpu.memory_space<smem>>
      %c0_i32_126 = arith.constant 0 : i32
      %c0_i32_127 = arith.constant 0 : i32
      %c6_i32_128 = arith.constant 6 : i32
      %c0_i32_129 = arith.constant 0 : i32
      %194 = tpu.memref_slice %arg2[%193, %c0_i32_129] : memref<512x256xf32, #tpu.memory_space<any>> -> memref<1x256xf32, #tpu.memory_space<any>>
      %c6_i32_130 = arith.constant 6 : i32
      %c0_i32_131 = arith.constant 0 : i32
      %195 = tpu.memref_slice %arg4[%c0_i32_126, %c6_i32_130, %c0_i32_131] : memref<2x16x256xf32, #tpu.memory_space<vmem>> -> memref<1x1x256xf32, #tpu.memory_space<vmem>>
      %196 = tpu.memref_squeeze %195 : memref<1x1x256xf32, #tpu.memory_space<vmem>> -> memref<1x256xf32, #tpu.memory_space<vmem>>
      %197 = tpu.memref_slice %arg5[%c0_i32_127, %c6_i32_128] : memref<2x16x!tpu.dma_semaphore, #tpu.memory_space<semaphore_mem>> -> memref<1x1x!tpu.dma_semaphore, #tpu.memory_space<semaphore_mem>>
      %198 = tpu.memref_squeeze %197 : memref<1x1x!tpu.dma_semaphore, #tpu.memory_space<semaphore_mem>> -> memref<!tpu.dma_semaphore, #tpu.memory_space<semaphore_mem>>
      tpu.enqueue_dma source(%194 : memref<1x256xf32, #tpu.memory_space<any>>) target(%196 : memref<1x256xf32, #tpu.memory_space<vmem>>) target_semaphore(%198 : memref<!tpu.dma_semaphore, #tpu.memory_space<semaphore_mem>>)
      %c7 = arith.constant 7 : index
      %199 = memref.load %arg1[%c7] : memref<16xi32, #tpu.memory_space<smem>>
      %c0_i32_132 = arith.constant 0 : i32
      %c0_i32_133 = arith.constant 0 : i32
      %c7_i32_134 = arith.constant 7 : i32
      %c0_i32_135 = arith.constant 0 : i32
      %200 = tpu.memref_slice %arg2[%199, %c0_i32_135] : memref<512x256xf32, #tpu.memory_space<any>> -> memref<1x256xf32, #tpu.memory_space<any>>
      %c7_i32_136 = arith.constant 7 : i32
      %c0_i32_137 = arith.constant 0 : i32
      %201 = tpu.memref_slice %arg4[%c0_i32_132, %c7_i32_136, %c0_i32_137] : memref<2x16x256xf32, #tpu.memory_space<vmem>> -> memref<1x1x256xf32, #tpu.memory_space<vmem>>
      %202 = tpu.memref_squeeze %201 : memref<1x1x256xf32, #tpu.memory_space<vmem>> -> memref<1x256xf32, #tpu.memory_space<vmem>>
      %203 = tpu.memref_slice %arg5[%c0_i32_133, %c7_i32_134] : memref<2x16x!tpu.dma_semaphore, #tpu.memory_space<semaphore_mem>> -> memref<1x1x!tpu.dma_semaphore, #tpu.memory_space<semaphore_mem>>
      %204 = tpu.memref_squeeze %203 : memref<1x1x!tpu.dma_semaphore, #tpu.memory_space<semaphore_mem>> -> memref<!tpu.dma_semaphore, #tpu.memory_space<semaphore_mem>>
      tpu.enqueue_dma source(%200 : memref<1x256xf32, #tpu.memory_space<any>>) target(%202 : memref<1x256xf32, #tpu.memory_space<vmem>>) target_semaphore(%204 : memref<!tpu.dma_semaphore, #tpu.memory_space<semaphore_mem>>)
      %c8 = arith.constant 8 : index
      %205 = memref.load %arg1[%c8] : memref<16xi32, #tpu.memory_space<smem>>
      %c0_i32_138 = arith.constant 0 : i32
      %c0_i32_139 = arith.constant 0 : i32
      %c8_i32_140 = arith.constant 8 : i32
      %c0_i32_141 = arith.constant 0 : i32
      %206 = tpu.memref_slice %arg2[%205, %c0_i32_141] : memref<512x256xf32, #tpu.memory_space<any>> -> memref<1x256xf32, #tpu.memory_space<any>>
      %c8_i32_142 = arith.constant 8 : i32
      %c0_i32_143 = arith.constant 0 : i32
      %207 = tpu.memref_slice %arg4[%c0_i32_138, %c8_i32_142, %c0_i32_143] : memref<2x16x256xf32, #tpu.memory_space<vmem>> -> memref<1x1x256xf32, #tpu.memory_space<vmem>>
      %208 = tpu.memref_squeeze %207 : memref<1x1x256xf32, #tpu.memory_space<vmem>> -> memref<1x256xf32, #tpu.memory_space<vmem>>
      %209 = tpu.memref_slice %arg5[%c0_i32_139, %c8_i32_140] : memref<2x16x!tpu.dma_semaphore, #tpu.memory_space<semaphore_mem>> -> memref<1x1x!tpu.dma_semaphore, #tpu.memory_space<semaphore_mem>>
      %210 = tpu.memref_squeeze %209 : memref<1x1x!tpu.dma_semaphore, #tpu.memory_space<semaphore_mem>> -> memref<!tpu.dma_semaphore, #tpu.memory_space<semaphore_mem>>
      tpu.enqueue_dma source(%206 : memref<1x256xf32, #tpu.memory_space<any>>) target(%208 : memref<1x256xf32, #tpu.memory_space<vmem>>) target_semaphore(%210 : memref<!tpu.dma_semaphore, #tpu.memory_space<semaphore_mem>>)
      %c9 = arith.constant 9 : index
      %211 = memref.load %arg1[%c9] : memref<16xi32, #tpu.memory_space<smem>>
      %c0_i32_144 = arith.constant 0 : i32
      %c0_i32_145 = arith.constant 0 : i32
      %c9_i32_146 = arith.constant 9 : i32
      %c0_i32_147 = arith.constant 0 : i32
      %212 = tpu.memref_slice %arg2[%211, %c0_i32_147] : memref<512x256xf32, #tpu.memory_space<any>> -> memref<1x256xf32, #tpu.memory_space<any>>
      %c9_i32_148 = arith.constant 9 : i32
      %c0_i32_149 = arith.constant 0 : i32
      %213 = tpu.memref_slice %arg4[%c0_i32_144, %c9_i32_148, %c0_i32_149] : memref<2x16x256xf32, #tpu.memory_space<vmem>> -> memref<1x1x256xf32, #tpu.memory_space<vmem>>
      %214 = tpu.memref_squeeze %213 : memref<1x1x256xf32, #tpu.memory_space<vmem>> -> memref<1x256xf32, #tpu.memory_space<vmem>>
      %215 = tpu.memref_slice %arg5[%c0_i32_145, %c9_i32_146] : memref<2x16x!tpu.dma_semaphore, #tpu.memory_space<semaphore_mem>> -> memref<1x1x!tpu.dma_semaphore, #tpu.memory_space<semaphore_mem>>
      %216 = tpu.memref_squeeze %215 : memref<1x1x!tpu.dma_semaphore, #tpu.memory_space<semaphore_mem>> -> memref<!tpu.dma_semaphore, #tpu.memory_space<semaphore_mem>>
      tpu.enqueue_dma source(%212 : memref<1x256xf32, #tpu.memory_space<any>>) target(%214 : memref<1x256xf32, #tpu.memory_space<vmem>>) target_semaphore(%216 : memref<!tpu.dma_semaphore, #tpu.memory_space<semaphore_mem>>)
      %c10 = arith.constant 10 : index
      %217 = memref.load %arg1[%c10] : memref<16xi32, #tpu.memory_space<smem>>
      %c0_i32_150 = arith.constant 0 : i32
      %c0_i32_151 = arith.constant 0 : i32
      %c10_i32_152 = arith.constant 10 : i32
      %c0_i32_153 = arith.constant 0 : i32
      %218 = tpu.memref_slice %arg2[%217, %c0_i32_153] : memref<512x256xf32, #tpu.memory_space<any>> -> memref<1x256xf32, #tpu.memory_space<any>>
      %c10_i32_154 = arith.constant 10 : i32
      %c0_i32_155 = arith.constant 0 : i32
      %219 = tpu.memref_slice %arg4[%c0_i32_150, %c10_i32_154, %c0_i32_155] : memref<2x16x256xf32, #tpu.memory_space<vmem>> -> memref<1x1x256xf32, #tpu.memory_space<vmem>>
      %220 = tpu.memref_squeeze %219 : memref<1x1x256xf32, #tpu.memory_space<vmem>> -> memref<1x256xf32, #tpu.memory_space<vmem>>
      %221 = tpu.memref_slice %arg5[%c0_i32_151, %c10_i32_152] : memref<2x16x!tpu.dma_semaphore, #tpu.memory_space<semaphore_mem>> -> memref<1x1x!tpu.dma_semaphore, #tpu.memory_space<semaphore_mem>>
      %222 = tpu.memref_squeeze %221 : memref<1x1x!tpu.dma_semaphore, #tpu.memory_space<semaphore_mem>> -> memref<!tpu.dma_semaphore, #tpu.memory_space<semaphore_mem>>
      tpu.enqueue_dma source(%218 : memref<1x256xf32, #tpu.memory_space<any>>) target(%220 : memref<1x256xf32, #tpu.memory_space<vmem>>) target_semaphore(%222 : memref<!tpu.dma_semaphore, #tpu.memory_space<semaphore_mem>>)
      %c11 = arith.constant 11 : index
      %223 = memref.load %arg1[%c11] : memref<16xi32, #tpu.memory_space<smem>>
      %c0_i32_156 = arith.constant 0 : i32
      %c0_i32_157 = arith.constant 0 : i32
      %c11_i32_158 = arith.constant 11 : i32
      %c0_i32_159 = arith.constant 0 : i32
      %224 = tpu.memref_slice %arg2[%223, %c0_i32_159] : memref<512x256xf32, #tpu.memory_space<any>> -> memref<1x256xf32, #tpu.memory_space<any>>
      %c11_i32_160 = arith.constant 11 : i32
      %c0_i32_161 = arith.constant 0 : i32
      %225 = tpu.memref_slice %arg4[%c0_i32_156, %c11_i32_160, %c0_i32_161] : memref<2x16x256xf32, #tpu.memory_space<vmem>> -> memref<1x1x256xf32, #tpu.memory_space<vmem>>
      %226 = tpu.memref_squeeze %225 : memref<1x1x256xf32, #tpu.memory_space<vmem>> -> memref<1x256xf32, #tpu.memory_space<vmem>>
      %227 = tpu.memref_slice %arg5[%c0_i32_157, %c11_i32_158] : memref<2x16x!tpu.dma_semaphore, #tpu.memory_space<semaphore_mem>> -> memref<1x1x!tpu.dma_semaphore, #tpu.memory_space<semaphore_mem>>
      %228 = tpu.memref_squeeze %227 : memref<1x1x!tpu.dma_semaphore, #tpu.memory_space<semaphore_mem>> -> memref<!tpu.dma_semaphore, #tpu.memory_space<semaphore_mem>>
      tpu.enqueue_dma source(%224 : memref<1x256xf32, #tpu.memory_space<any>>) target(%226 : memref<1x256xf32, #tpu.memory_space<vmem>>) target_semaphore(%228 : memref<!tpu.dma_semaphore, #tpu.memory_space<semaphore_mem>>)
      %c12 = arith.constant 12 : index
      %229 = memref.load %arg1[%c12] : memref<16xi32, #tpu.memory_space<smem>>
      %c0_i32_162 = arith.constant 0 : i32
      %c0_i32_163 = arith.constant 0 : i32
      %c12_i32_164 = arith.constant 12 : i32
      %c0_i32_165 = arith.constant 0 : i32
      %230 = tpu.memref_slice %arg2[%229, %c0_i32_165] : memref<512x256xf32, #tpu.memory_space<any>> -> memref<1x256xf32, #tpu.memory_space<any>>
      %c12_i32_166 = arith.constant 12 : i32
      %c0_i32_167 = arith.constant 0 : i32
      %231 = tpu.memref_slice %arg4[%c0_i32_162, %c12_i32_166, %c0_i32_167] : memref<2x16x256xf32, #tpu.memory_space<vmem>> -> memref<1x1x256xf32, #tpu.memory_space<vmem>>
      %232 = tpu.memref_squeeze %231 : memref<1x1x256xf32, #tpu.memory_space<vmem>> -> memref<1x256xf32, #tpu.memory_space<vmem>>
      %233 = tpu.memref_slice %arg5[%c0_i32_163, %c12_i32_164] : memref<2x16x!tpu.dma_semaphore, #tpu.memory_space<semaphore_mem>> -> memref<1x1x!tpu.dma_semaphore, #tpu.memory_space<semaphore_mem>>
      %234 = tpu.memref_squeeze %233 : memref<1x1x!tpu.dma_semaphore, #tpu.memory_space<semaphore_mem>> -> memref<!tpu.dma_semaphore, #tpu.memory_space<semaphore_mem>>
      tpu.enqueue_dma source(%230 : memref<1x256xf32, #tpu.memory_space<any>>) target(%232 : memref<1x256xf32, #tpu.memory_space<vmem>>) target_semaphore(%234 : memref<!tpu.dma_semaphore, #tpu.memory_space<semaphore_mem>>)
      %c13 = arith.constant 13 : index
      %235 = memref.load %arg1[%c13] : memref<16xi32, #tpu.memory_space<smem>>
      %c0_i32_168 = arith.constant 0 : i32
      %c0_i32_169 = arith.constant 0 : i32
      %c13_i32_170 = arith.constant 13 : i32
      %c0_i32_171 = arith.constant 0 : i32
      %236 = tpu.memref_slice %arg2[%235, %c0_i32_171] : memref<512x256xf32, #tpu.memory_space<any>> -> memref<1x256xf32, #tpu.memory_space<any>>
      %c13_i32_172 = arith.constant 13 : i32
      %c0_i32_173 = arith.constant 0 : i32
      %237 = tpu.memref_slice %arg4[%c0_i32_168, %c13_i32_172, %c0_i32_173] : memref<2x16x256xf32, #tpu.memory_space<vmem>> -> memref<1x1x256xf32, #tpu.memory_space<vmem>>
      %238 = tpu.memref_squeeze %237 : memref<1x1x256xf32, #tpu.memory_space<vmem>> -> memref<1x256xf32, #tpu.memory_space<vmem>>
      %239 = tpu.memref_slice %arg5[%c0_i32_169, %c13_i32_170] : memref<2x16x!tpu.dma_semaphore, #tpu.memory_space<semaphore_mem>> -> memref<1x1x!tpu.dma_semaphore, #tpu.memory_space<semaphore_mem>>
      %240 = tpu.memref_squeeze %239 : memref<1x1x!tpu.dma_semaphore, #tpu.memory_space<semaphore_mem>> -> memref<!tpu.dma_semaphore, #tpu.memory_space<semaphore_mem>>
      tpu.enqueue_dma source(%236 : memref<1x256xf32, #tpu.memory_space<any>>) target(%238 : memref<1x256xf32, #tpu.memory_space<vmem>>) target_semaphore(%240 : memref<!tpu.dma_semaphore, #tpu.memory_space<semaphore_mem>>)
      %c14 = arith.constant 14 : index
      %241 = memref.load %arg1[%c14] : memref<16xi32, #tpu.memory_space<smem>>
      %c0_i32_174 = arith.constant 0 : i32
      %c0_i32_175 = arith.constant 0 : i32
      %c14_i32_176 = arith.constant 14 : i32
      %c0_i32_177 = arith.constant 0 : i32
      %242 = tpu.memref_slice %arg2[%241, %c0_i32_177] : memref<512x256xf32, #tpu.memory_space<any>> -> memref<1x256xf32, #tpu.memory_space<any>>
      %c14_i32_178 = arith.constant 14 : i32
      %c0_i32_179 = arith.constant 0 : i32
      %243 = tpu.memref_slice %arg4[%c0_i32_174, %c14_i32_178, %c0_i32_179] : memref<2x16x256xf32, #tpu.memory_space<vmem>> -> memref<1x1x256xf32, #tpu.memory_space<vmem>>
      %244 = tpu.memref_squeeze %243 : memref<1x1x256xf32, #tpu.memory_space<vmem>> -> memref<1x256xf32, #tpu.memory_space<vmem>>
      %245 = tpu.memref_slice %arg5[%c0_i32_175, %c14_i32_176] : memref<2x16x!tpu.dma_semaphore, #tpu.memory_space<semaphore_mem>> -> memref<1x1x!tpu.dma_semaphore, #tpu.memory_space<semaphore_mem>>
      %246 = tpu.memref_squeeze %245 : memref<1x1x!tpu.dma_semaphore, #tpu.memory_space<semaphore_mem>> -> memref<!tpu.dma_semaphore, #tpu.memory_space<semaphore_mem>>
      tpu.enqueue_dma source(%242 : memref<1x256xf32, #tpu.memory_space<any>>) target(%244 : memref<1x256xf32, #tpu.memory_space<vmem>>) target_semaphore(%246 : memref<!tpu.dma_semaphore, #tpu.memory_space<semaphore_mem>>)
      %c15 = arith.constant 15 : index
      %247 = memref.load %arg1[%c15] : memref<16xi32, #tpu.memory_space<smem>>
      %c0_i32_180 = arith.constant 0 : i32
      %c0_i32_181 = arith.constant 0 : i32
      %c15_i32_182 = arith.constant 15 : i32
      %c0_i32_183 = arith.constant 0 : i32
      %248 = tpu.memref_slice %arg2[%247, %c0_i32_183] : memref<512x256xf32, #tpu.memory_space<any>> -> memref<1x256xf32, #tpu.memory_space<any>>
      %c15_i32_184 = arith.constant 15 : i32
      %c0_i32_185 = arith.constant 0 : i32
      %249 = tpu.memref_slice %arg4[%c0_i32_180, %c15_i32_184, %c0_i32_185] : memref<2x16x256xf32, #tpu.memory_space<vmem>> -> memref<1x1x256xf32, #tpu.memory_space<vmem>>
      %250 = tpu.memref_squeeze %249 : memref<1x1x256xf32, #tpu.memory_space<vmem>> -> memref<1x256xf32, #tpu.memory_space<vmem>>
      %251 = tpu.memref_slice %arg5[%c0_i32_181, %c15_i32_182] : memref<2x16x!tpu.dma_semaphore, #tpu.memory_space<semaphore_mem>> -> memref<1x1x!tpu.dma_semaphore, #tpu.memory_space<semaphore_mem>>
      %252 = tpu.memref_squeeze %251 : memref<1x1x!tpu.dma_semaphore, #tpu.memory_space<semaphore_mem>> -> memref<!tpu.dma_semaphore, #tpu.memory_space<semaphore_mem>>
      tpu.enqueue_dma source(%248 : memref<1x256xf32, #tpu.memory_space<any>>) target(%250 : memref<1x256xf32, #tpu.memory_space<vmem>>) target_semaphore(%252 : memref<!tpu.dma_semaphore, #tpu.memory_space<semaphore_mem>>)
    } else {
    }
    %c1_i32_2 = arith.constant 1 : i32
    %5 = arith.addi %arg0, %c1_i32_2 : i32
    %c1_i32_3 = arith.constant 1 : i32
    %6 = arith.cmpi slt, %5, %c1_i32_3 : i32
    %7 = arith.extui %6 : i1 to i32
    %c0_i32_4 = arith.constant 0 : i32
    %8 = arith.cmpi ne, %7, %c0_i32_4 : i32
    scf.if %8 {
      %c1_i32_89 = arith.constant 1 : i32
      %157 = arith.addi %arg0, %c1_i32_89 : i32
      %c16_i32_90 = arith.constant 16 : i32
      %158 = arith.muli %157, %c16_i32_90 : i32
      %c0_i32_91 = arith.constant 0 : i32
      %159 = arith.addi %158, %c0_i32_91 : i32
      %160 = arith.index_cast %159 : i32 to index
      %161 = memref.load %arg1[%160] : memref<16xi32, #tpu.memory_space<smem>>
      %c0_i32_92 = arith.constant 0 : i32
      %c0_i32_93 = arith.constant 0 : i32
      %162 = tpu.memref_slice %arg2[%161, %c0_i32_93] : memref<512x256xf32, #tpu.memory_space<any>> -> memref<1x256xf32, #tpu.memory_space<any>>
      %c0_i32_94 = arith.constant 0 : i32
      %c0_i32_95 = arith.constant 0 : i32
      %163 = tpu.memref_slice %arg4[%1, %c0_i32_94, %c0_i32_95] : memref<2x16x256xf32, #tpu.memory_space<vmem>> -> memref<1x1x256xf32, #tpu.memory_space<vmem>>
      %164 = tpu.memref_squeeze %163 : memref<1x1x256xf32, #tpu.memory_space<vmem>> -> memref<1x256xf32, #tpu.memory_space<vmem>>
      %165 = tpu.memref_slice %arg5[%1, %c0_i32_92] : memref<2x16x!tpu.dma_semaphore, #tpu.memory_space<semaphore_mem>> -> memref<1x1x!tpu.dma_semaphore, #tpu.memory_space<semaphore_mem>>
      %166 = tpu.memref_squeeze %165 : memref<1x1x!tpu.dma_semaphore, #tpu.memory_space<semaphore_mem>> -> memref<!tpu.dma_semaphore, #tpu.memory_space<semaphore_mem>>
      tpu.enqueue_dma source(%162 : memref<1x256xf32, #tpu.memory_space<any>>) target(%164 : memref<1x256xf32, #tpu.memory_space<vmem>>) target_semaphore(%166 : memref<!tpu.dma_semaphore, #tpu.memory_space<semaphore_mem>>)
      %c1_i32_96 = arith.constant 1 : i32
      %167 = arith.addi %arg0, %c1_i32_96 : i32
      %c16_i32_97 = arith.constant 16 : i32
      %168 = arith.muli %167, %c16_i32_97 : i32
      %c1_i32_98 = arith.constant 1 : i32
      %169 = arith.addi %168, %c1_i32_98 : i32
      %170 = arith.index_cast %169 : i32 to index
      %171 = memref.load %arg1[%170] : memref<16xi32, #tpu.memory_space<smem>>
      %c1_i32_99 = arith.constant 1 : i32
      %c0_i32_100 = arith.constant 0 : i32
      %172 = tpu.memref_slice %arg2[%171, %c0_i32_100] : memref<512x256xf32, #tpu.memory_space<any>> -> memref<1x256xf32, #tpu.memory_space<any>>
      %c1_i32_101 = arith.constant 1 : i32
      %c0_i32_102 = arith.constant 0 : i32
      %173 = tpu.memref_slice %arg4[%1, %c1_i32_101, %c0_i32_102] : memref<2x16x256xf32, #tpu.memory_space<vmem>> -> memref<1x1x256xf32, #tpu.memory_space<vmem>>
      %174 = tpu.memref_squeeze %173 : memref<1x1x256xf32, #tpu.memory_space<vmem>> -> memref<1x256xf32, #tpu.memory_space<vmem>>
      %175 = tpu.memref_slice %arg5[%1, %c1_i32_99] : memref<2x16x!tpu.dma_semaphore, #tpu.memory_space<semaphore_mem>> -> memref<1x1x!tpu.dma_semaphore, #tpu.memory_space<semaphore_mem>>
      %176 = tpu.memref_squeeze %175 : memref<1x1x!tpu.dma_semaphore, #tpu.memory_space<semaphore_mem>> -> memref<!tpu.dma_semaphore, #tpu.memory_space<semaphore_mem>>
      tpu.enqueue_dma source(%172 : memref<1x256xf32, #tpu.memory_space<any>>) target(%174 : memref<1x256xf32, #tpu.memory_space<vmem>>) target_semaphore(%176 : memref<!tpu.dma_semaphore, #tpu.memory_space<semaphore_mem>>)
      %c1_i32_103 = arith.constant 1 : i32
      %177 = arith.addi %arg0, %c1_i32_103 : i32
      %c16_i32_104 = arith.constant 16 : i32
      %178 = arith.muli %177, %c16_i32_104 : i32
      %c2_i32_105 = arith.constant 2 : i32
      %179 = arith.addi %178, %c2_i32_105 : i32
      %180 = arith.index_cast %179 : i32 to index
      %181 = memref.load %arg1[%180] : memref<16xi32, #tpu.memory_space<smem>>
      %c2_i32_106 = arith.constant 2 : i32
      %c0_i32_107 = arith.constant 0 : i32
      %182 = tpu.memref_slice %arg2[%181, %c0_i32_107] : memref<512x256xf32, #tpu.memory_space<any>> -> memref<1x256xf32, #tpu.memory_space<any>>
      %c2_i32_108 = arith.constant 2 : i32
      %c0_i32_109 = arith.constant 0 : i32
      %183 = tpu.memref_slice %arg4[%1, %c2_i32_108, %c0_i32_109] : memref<2x16x256xf32, #tpu.memory_space<vmem>> -> memref<1x1x256xf32, #tpu.memory_space<vmem>>
      %184 = tpu.memref_squeeze %183 : memref<1x1x256xf32, #tpu.memory_space<vmem>> -> memref<1x256xf32, #tpu.memory_space<vmem>>
      %185 = tpu.memref_slice %arg5[%1, %c2_i32_106] : memref<2x16x!tpu.dma_semaphore, #tpu.memory_space<semaphore_mem>> -> memref<1x1x!tpu.dma_semaphore, #tpu.memory_space<semaphore_mem>>
      %186 = tpu.memref_squeeze %185 : memref<1x1x!tpu.dma_semaphore, #tpu.memory_space<semaphore_mem>> -> memref<!tpu.dma_semaphore, #tpu.memory_space<semaphore_mem>>
      tpu.enqueue_dma source(%182 : memref<1x256xf32, #tpu.memory_space<any>>) target(%184 : memref<1x256xf32, #tpu.memory_space<vmem>>) target_semaphore(%186 : memref<!tpu.dma_semaphore, #tpu.memory_space<semaphore_mem>>)
      %c1_i32_110 = arith.constant 1 : i32
      %187 = arith.addi %arg0, %c1_i32_110 : i32
      %c16_i32_111 = arith.constant 16 : i32
      %188 = arith.muli %187, %c16_i32_111 : i32
      %c3_i32_112 = arith.constant 3 : i32
      %189 = arith.addi %188, %c3_i32_112 : i32
      %190 = arith.index_cast %189 : i32 to index
      %191 = memref.load %arg1[%190] : memref<16xi32, #tpu.memory_space<smem>>
      %c3_i32_113 = arith.constant 3 : i32
      %c0_i32_114 = arith.constant 0 : i32
      %192 = tpu.memref_slice %arg2[%191, %c0_i32_114] : memref<512x256xf32, #tpu.memory_space<any>> -> memref<1x256xf32, #tpu.memory_space<any>>
      %c3_i32_115 = arith.constant 3 : i32
      %c0_i32_116 = arith.constant 0 : i32
      %193 = tpu.memref_slice %arg4[%1, %c3_i32_115, %c0_i32_116] : memref<2x16x256xf32, #tpu.memory_space<vmem>> -> memref<1x1x256xf32, #tpu.memory_space<vmem>>
      %194 = tpu.memref_squeeze %193 : memref<1x1x256xf32, #tpu.memory_space<vmem>> -> memref<1x256xf32, #tpu.memory_space<vmem>>
      %195 = tpu.memref_slice %arg5[%1, %c3_i32_113] : memref<2x16x!tpu.dma_semaphore, #tpu.memory_space<semaphore_mem>> -> memref<1x1x!tpu.dma_semaphore, #tpu.memory_space<semaphore_mem>>
      %196 = tpu.memref_squeeze %195 : memref<1x1x!tpu.dma_semaphore, #tpu.memory_space<semaphore_mem>> -> memref<!tpu.dma_semaphore, #tpu.memory_space<semaphore_mem>>
      tpu.enqueue_dma source(%192 : memref<1x256xf32, #tpu.memory_space<any>>) target(%194 : memref<1x256xf32, #tpu.memory_space<vmem>>) target_semaphore(%196 : memref<!tpu.dma_semaphore, #tpu.memory_space<semaphore_mem>>)
      %c1_i32_117 = arith.constant 1 : i32
      %197 = arith.addi %arg0, %c1_i32_117 : i32
      %c16_i32_118 = arith.constant 16 : i32
      %198 = arith.muli %197, %c16_i32_118 : i32
      %c4_i32_119 = arith.constant 4 : i32
      %199 = arith.addi %198, %c4_i32_119 : i32
      %200 = arith.index_cast %199 : i32 to index
      %201 = memref.load %arg1[%200] : memref<16xi32, #tpu.memory_space<smem>>
      %c4_i32_120 = arith.constant 4 : i32
      %c0_i32_121 = arith.constant 0 : i32
      %202 = tpu.memref_slice %arg2[%201, %c0_i32_121] : memref<512x256xf32, #tpu.memory_space<any>> -> memref<1x256xf32, #tpu.memory_space<any>>
      %c4_i32_122 = arith.constant 4 : i32
      %c0_i32_123 = arith.constant 0 : i32
      %203 = tpu.memref_slice %arg4[%1, %c4_i32_122, %c0_i32_123] : memref<2x16x256xf32, #tpu.memory_space<vmem>> -> memref<1x1x256xf32, #tpu.memory_space<vmem>>
      %204 = tpu.memref_squeeze %203 : memref<1x1x256xf32, #tpu.memory_space<vmem>> -> memref<1x256xf32, #tpu.memory_space<vmem>>
      %205 = tpu.memref_slice %arg5[%1, %c4_i32_120] : memref<2x16x!tpu.dma_semaphore, #tpu.memory_space<semaphore_mem>> -> memref<1x1x!tpu.dma_semaphore, #tpu.memory_space<semaphore_mem>>
      %206 = tpu.memref_squeeze %205 : memref<1x1x!tpu.dma_semaphore, #tpu.memory_space<semaphore_mem>> -> memref<!tpu.dma_semaphore, #tpu.memory_space<semaphore_mem>>
      tpu.enqueue_dma source(%202 : memref<1x256xf32, #tpu.memory_space<any>>) target(%204 : memref<1x256xf32, #tpu.memory_space<vmem>>) target_semaphore(%206 : memref<!tpu.dma_semaphore, #tpu.memory_space<semaphore_mem>>)
      %c1_i32_124 = arith.constant 1 : i32
      %207 = arith.addi %arg0, %c1_i32_124 : i32
      %c16_i32_125 = arith.constant 16 : i32
      %208 = arith.muli %207, %c16_i32_125 : i32
      %c5_i32_126 = arith.constant 5 : i32
      %209 = arith.addi %208, %c5_i32_126 : i32
      %210 = arith.index_cast %209 : i32 to index
      %211 = memref.load %arg1[%210] : memref<16xi32, #tpu.memory_space<smem>>
      %c5_i32_127 = arith.constant 5 : i32
      %c0_i32_128 = arith.constant 0 : i32
      %212 = tpu.memref_slice %arg2[%211, %c0_i32_128] : memref<512x256xf32, #tpu.memory_space<any>> -> memref<1x256xf32, #tpu.memory_space<any>>
      %c5_i32_129 = arith.constant 5 : i32
      %c0_i32_130 = arith.constant 0 : i32
      %213 = tpu.memref_slice %arg4[%1, %c5_i32_129, %c0_i32_130] : memref<2x16x256xf32, #tpu.memory_space<vmem>> -> memref<1x1x256xf32, #tpu.memory_space<vmem>>
      %214 = tpu.memref_squeeze %213 : memref<1x1x256xf32, #tpu.memory_space<vmem>> -> memref<1x256xf32, #tpu.memory_space<vmem>>
      %215 = tpu.memref_slice %arg5[%1, %c5_i32_127] : memref<2x16x!tpu.dma_semaphore, #tpu.memory_space<semaphore_mem>> -> memref<1x1x!tpu.dma_semaphore, #tpu.memory_space<semaphore_mem>>
      %216 = tpu.memref_squeeze %215 : memref<1x1x!tpu.dma_semaphore, #tpu.memory_space<semaphore_mem>> -> memref<!tpu.dma_semaphore, #tpu.memory_space<semaphore_mem>>
      tpu.enqueue_dma source(%212 : memref<1x256xf32, #tpu.memory_space<any>>) target(%214 : memref<1x256xf32, #tpu.memory_space<vmem>>) target_semaphore(%216 : memref<!tpu.dma_semaphore, #tpu.memory_space<semaphore_mem>>)
      %c1_i32_131 = arith.constant 1 : i32
      %217 = arith.addi %arg0, %c1_i32_131 : i32
      %c16_i32_132 = arith.constant 16 : i32
      %218 = arith.muli %217, %c16_i32_132 : i32
      %c6_i32_133 = arith.constant 6 : i32
      %219 = arith.addi %218, %c6_i32_133 : i32
      %220 = arith.index_cast %219 : i32 to index
      %221 = memref.load %arg1[%220] : memref<16xi32, #tpu.memory_space<smem>>
      %c6_i32_134 = arith.constant 6 : i32
      %c0_i32_135 = arith.constant 0 : i32
      %222 = tpu.memref_slice %arg2[%221, %c0_i32_135] : memref<512x256xf32, #tpu.memory_space<any>> -> memref<1x256xf32, #tpu.memory_space<any>>
      %c6_i32_136 = arith.constant 6 : i32
      %c0_i32_137 = arith.constant 0 : i32
      %223 = tpu.memref_slice %arg4[%1, %c6_i32_136, %c0_i32_137] : memref<2x16x256xf32, #tpu.memory_space<vmem>> -> memref<1x1x256xf32, #tpu.memory_space<vmem>>
      %224 = tpu.memref_squeeze %223 : memref<1x1x256xf32, #tpu.memory_space<vmem>> -> memref<1x256xf32, #tpu.memory_space<vmem>>
      %225 = tpu.memref_slice %arg5[%1, %c6_i32_134] : memref<2x16x!tpu.dma_semaphore, #tpu.memory_space<semaphore_mem>> -> memref<1x1x!tpu.dma_semaphore, #tpu.memory_space<semaphore_mem>>
      %226 = tpu.memref_squeeze %225 : memref<1x1x!tpu.dma_semaphore, #tpu.memory_space<semaphore_mem>> -> memref<!tpu.dma_semaphore, #tpu.memory_space<semaphore_mem>>
      tpu.enqueue_dma source(%222 : memref<1x256xf32, #tpu.memory_space<any>>) target(%224 : memref<1x256xf32, #tpu.memory_space<vmem>>) target_semaphore(%226 : memref<!tpu.dma_semaphore, #tpu.memory_space<semaphore_mem>>)
      %c1_i32_138 = arith.constant 1 : i32
      %227 = arith.addi %arg0, %c1_i32_138 : i32
      %c16_i32_139 = arith.constant 16 : i32
      %228 = arith.muli %227, %c16_i32_139 : i32
      %c7_i32_140 = arith.constant 7 : i32
      %229 = arith.addi %228, %c7_i32_140 : i32
      %230 = arith.index_cast %229 : i32 to index
      %231 = memref.load %arg1[%230] : memref<16xi32, #tpu.memory_space<smem>>
      %c7_i32_141 = arith.constant 7 : i32
      %c0_i32_142 = arith.constant 0 : i32
      %232 = tpu.memref_slice %arg2[%231, %c0_i32_142] : memref<512x256xf32, #tpu.memory_space<any>> -> memref<1x256xf32, #tpu.memory_space<any>>
      %c7_i32_143 = arith.constant 7 : i32
      %c0_i32_144 = arith.constant 0 : i32
      %233 = tpu.memref_slice %arg4[%1, %c7_i32_143, %c0_i32_144] : memref<2x16x256xf32, #tpu.memory_space<vmem>> -> memref<1x1x256xf32, #tpu.memory_space<vmem>>
      %234 = tpu.memref_squeeze %233 : memref<1x1x256xf32, #tpu.memory_space<vmem>> -> memref<1x256xf32, #tpu.memory_space<vmem>>
      %235 = tpu.memref_slice %arg5[%1, %c7_i32_141] : memref<2x16x!tpu.dma_semaphore, #tpu.memory_space<semaphore_mem>> -> memref<1x1x!tpu.dma_semaphore, #tpu.memory_space<semaphore_mem>>
      %236 = tpu.memref_squeeze %235 : memref<1x1x!tpu.dma_semaphore, #tpu.memory_space<semaphore_mem>> -> memref<!tpu.dma_semaphore, #tpu.memory_space<semaphore_mem>>
      tpu.enqueue_dma source(%232 : memref<1x256xf32, #tpu.memory_space<any>>) target(%234 : memref<1x256xf32, #tpu.memory_space<vmem>>) target_semaphore(%236 : memref<!tpu.dma_semaphore, #tpu.memory_space<semaphore_mem>>)
      %c1_i32_145 = arith.constant 1 : i32
      %237 = arith.addi %arg0, %c1_i32_145 : i32
      %c16_i32_146 = arith.constant 16 : i32
      %238 = arith.muli %237, %c16_i32_146 : i32
      %c8_i32_147 = arith.constant 8 : i32
      %239 = arith.addi %238, %c8_i32_147 : i32
      %240 = arith.index_cast %239 : i32 to index
      %241 = memref.load %arg1[%240] : memref<16xi32, #tpu.memory_space<smem>>
      %c8_i32_148 = arith.constant 8 : i32
      %c0_i32_149 = arith.constant 0 : i32
      %242 = tpu.memref_slice %arg2[%241, %c0_i32_149] : memref<512x256xf32, #tpu.memory_space<any>> -> memref<1x256xf32, #tpu.memory_space<any>>
      %c8_i32_150 = arith.constant 8 : i32
      %c0_i32_151 = arith.constant 0 : i32
      %243 = tpu.memref_slice %arg4[%1, %c8_i32_150, %c0_i32_151] : memref<2x16x256xf32, #tpu.memory_space<vmem>> -> memref<1x1x256xf32, #tpu.memory_space<vmem>>
      %244 = tpu.memref_squeeze %243 : memref<1x1x256xf32, #tpu.memory_space<vmem>> -> memref<1x256xf32, #tpu.memory_space<vmem>>
      %245 = tpu.memref_slice %arg5[%1, %c8_i32_148] : memref<2x16x!tpu.dma_semaphore, #tpu.memory_space<semaphore_mem>> -> memref<1x1x!tpu.dma_semaphore, #tpu.memory_space<semaphore_mem>>
      %246 = tpu.memref_squeeze %245 : memref<1x1x!tpu.dma_semaphore, #tpu.memory_space<semaphore_mem>> -> memref<!tpu.dma_semaphore, #tpu.memory_space<semaphore_mem>>
      tpu.enqueue_dma source(%242 : memref<1x256xf32, #tpu.memory_space<any>>) target(%244 : memref<1x256xf32, #tpu.memory_space<vmem>>) target_semaphore(%246 : memref<!tpu.dma_semaphore, #tpu.memory_space<semaphore_mem>>)
      %c1_i32_152 = arith.constant 1 : i32
      %247 = arith.addi %arg0, %c1_i32_152 : i32
      %c16_i32_153 = arith.constant 16 : i32
      %248 = arith.muli %247, %c16_i32_153 : i32
      %c9_i32_154 = arith.constant 9 : i32
      %249 = arith.addi %248, %c9_i32_154 : i32
      %250 = arith.index_cast %249 : i32 to index
      %251 = memref.load %arg1[%250] : memref<16xi32, #tpu.memory_space<smem>>
      %c9_i32_155 = arith.constant 9 : i32
      %c0_i32_156 = arith.constant 0 : i32
      %252 = tpu.memref_slice %arg2[%251, %c0_i32_156] : memref<512x256xf32, #tpu.memory_space<any>> -> memref<1x256xf32, #tpu.memory_space<any>>
      %c9_i32_157 = arith.constant 9 : i32
      %c0_i32_158 = arith.constant 0 : i32
      %253 = tpu.memref_slice %arg4[%1, %c9_i32_157, %c0_i32_158] : memref<2x16x256xf32, #tpu.memory_space<vmem>> -> memref<1x1x256xf32, #tpu.memory_space<vmem>>
      %254 = tpu.memref_squeeze %253 : memref<1x1x256xf32, #tpu.memory_space<vmem>> -> memref<1x256xf32, #tpu.memory_space<vmem>>
      %255 = tpu.memref_slice %arg5[%1, %c9_i32_155] : memref<2x16x!tpu.dma_semaphore, #tpu.memory_space<semaphore_mem>> -> memref<1x1x!tpu.dma_semaphore, #tpu.memory_space<semaphore_mem>>
      %256 = tpu.memref_squeeze %255 : memref<1x1x!tpu.dma_semaphore, #tpu.memory_space<semaphore_mem>> -> memref<!tpu.dma_semaphore, #tpu.memory_space<semaphore_mem>>
      tpu.enqueue_dma source(%252 : memref<1x256xf32, #tpu.memory_space<any>>) target(%254 : memref<1x256xf32, #tpu.memory_space<vmem>>) target_semaphore(%256 : memref<!tpu.dma_semaphore, #tpu.memory_space<semaphore_mem>>)
      %c1_i32_159 = arith.constant 1 : i32
      %257 = arith.addi %arg0, %c1_i32_159 : i32
      %c16_i32_160 = arith.constant 16 : i32
      %258 = arith.muli %257, %c16_i32_160 : i32
      %c10_i32_161 = arith.constant 10 : i32
      %259 = arith.addi %258, %c10_i32_161 : i32
      %260 = arith.index_cast %259 : i32 to index
      %261 = memref.load %arg1[%260] : memref<16xi32, #tpu.memory_space<smem>>
      %c10_i32_162 = arith.constant 10 : i32
      %c0_i32_163 = arith.constant 0 : i32
      %262 = tpu.memref_slice %arg2[%261, %c0_i32_163] : memref<512x256xf32, #tpu.memory_space<any>> -> memref<1x256xf32, #tpu.memory_space<any>>
      %c10_i32_164 = arith.constant 10 : i32
      %c0_i32_165 = arith.constant 0 : i32
      %263 = tpu.memref_slice %arg4[%1, %c10_i32_164, %c0_i32_165] : memref<2x16x256xf32, #tpu.memory_space<vmem>> -> memref<1x1x256xf32, #tpu.memory_space<vmem>>
      %264 = tpu.memref_squeeze %263 : memref<1x1x256xf32, #tpu.memory_space<vmem>> -> memref<1x256xf32, #tpu.memory_space<vmem>>
      %265 = tpu.memref_slice %arg5[%1, %c10_i32_162] : memref<2x16x!tpu.dma_semaphore, #tpu.memory_space<semaphore_mem>> -> memref<1x1x!tpu.dma_semaphore, #tpu.memory_space<semaphore_mem>>
      %266 = tpu.memref_squeeze %265 : memref<1x1x!tpu.dma_semaphore, #tpu.memory_space<semaphore_mem>> -> memref<!tpu.dma_semaphore, #tpu.memory_space<semaphore_mem>>
      tpu.enqueue_dma source(%262 : memref<1x256xf32, #tpu.memory_space<any>>) target(%264 : memref<1x256xf32, #tpu.memory_space<vmem>>) target_semaphore(%266 : memref<!tpu.dma_semaphore, #tpu.memory_space<semaphore_mem>>)
      %c1_i32_166 = arith.constant 1 : i32
      %267 = arith.addi %arg0, %c1_i32_166 : i32
      %c16_i32_167 = arith.constant 16 : i32
      %268 = arith.muli %267, %c16_i32_167 : i32
      %c11_i32_168 = arith.constant 11 : i32
      %269 = arith.addi %268, %c11_i32_168 : i32
      %270 = arith.index_cast %269 : i32 to index
      %271 = memref.load %arg1[%270] : memref<16xi32, #tpu.memory_space<smem>>
      %c11_i32_169 = arith.constant 11 : i32
      %c0_i32_170 = arith.constant 0 : i32
      %272 = tpu.memref_slice %arg2[%271, %c0_i32_170] : memref<512x256xf32, #tpu.memory_space<any>> -> memref<1x256xf32, #tpu.memory_space<any>>
      %c11_i32_171 = arith.constant 11 : i32
      %c0_i32_172 = arith.constant 0 : i32
      %273 = tpu.memref_slice %arg4[%1, %c11_i32_171, %c0_i32_172] : memref<2x16x256xf32, #tpu.memory_space<vmem>> -> memref<1x1x256xf32, #tpu.memory_space<vmem>>
      %274 = tpu.memref_squeeze %273 : memref<1x1x256xf32, #tpu.memory_space<vmem>> -> memref<1x256xf32, #tpu.memory_space<vmem>>
      %275 = tpu.memref_slice %arg5[%1, %c11_i32_169] : memref<2x16x!tpu.dma_semaphore, #tpu.memory_space<semaphore_mem>> -> memref<1x1x!tpu.dma_semaphore, #tpu.memory_space<semaphore_mem>>
      %276 = tpu.memref_squeeze %275 : memref<1x1x!tpu.dma_semaphore, #tpu.memory_space<semaphore_mem>> -> memref<!tpu.dma_semaphore, #tpu.memory_space<semaphore_mem>>
      tpu.enqueue_dma source(%272 : memref<1x256xf32, #tpu.memory_space<any>>) target(%274 : memref<1x256xf32, #tpu.memory_space<vmem>>) target_semaphore(%276 : memref<!tpu.dma_semaphore, #tpu.memory_space<semaphore_mem>>)
      %c1_i32_173 = arith.constant 1 : i32
      %277 = arith.addi %arg0, %c1_i32_173 : i32
      %c16_i32_174 = arith.constant 16 : i32
      %278 = arith.muli %277, %c16_i32_174 : i32
      %c12_i32_175 = arith.constant 12 : i32
      %279 = arith.addi %278, %c12_i32_175 : i32
      %280 = arith.index_cast %279 : i32 to index
      %281 = memref.load %arg1[%280] : memref<16xi32, #tpu.memory_space<smem>>
      %c12_i32_176 = arith.constant 12 : i32
      %c0_i32_177 = arith.constant 0 : i32
      %282 = tpu.memref_slice %arg2[%281, %c0_i32_177] : memref<512x256xf32, #tpu.memory_space<any>> -> memref<1x256xf32, #tpu.memory_space<any>>
      %c12_i32_178 = arith.constant 12 : i32
      %c0_i32_179 = arith.constant 0 : i32
      %283 = tpu.memref_slice %arg4[%1, %c12_i32_178, %c0_i32_179] : memref<2x16x256xf32, #tpu.memory_space<vmem>> -> memref<1x1x256xf32, #tpu.memory_space<vmem>>
      %284 = tpu.memref_squeeze %283 : memref<1x1x256xf32, #tpu.memory_space<vmem>> -> memref<1x256xf32, #tpu.memory_space<vmem>>
      %285 = tpu.memref_slice %arg5[%1, %c12_i32_176] : memref<2x16x!tpu.dma_semaphore, #tpu.memory_space<semaphore_mem>> -> memref<1x1x!tpu.dma_semaphore, #tpu.memory_space<semaphore_mem>>
      %286 = tpu.memref_squeeze %285 : memref<1x1x!tpu.dma_semaphore, #tpu.memory_space<semaphore_mem>> -> memref<!tpu.dma_semaphore, #tpu.memory_space<semaphore_mem>>
      tpu.enqueue_dma source(%282 : memref<1x256xf32, #tpu.memory_space<any>>) target(%284 : memref<1x256xf32, #tpu.memory_space<vmem>>) target_semaphore(%286 : memref<!tpu.dma_semaphore, #tpu.memory_space<semaphore_mem>>)
      %c1_i32_180 = arith.constant 1 : i32
      %287 = arith.addi %arg0, %c1_i32_180 : i32
      %c16_i32_181 = arith.constant 16 : i32
      %288 = arith.muli %287, %c16_i32_181 : i32
      %c13_i32_182 = arith.constant 13 : i32
      %289 = arith.addi %288, %c13_i32_182 : i32
      %290 = arith.index_cast %289 : i32 to index
      %291 = memref.load %arg1[%290] : memref<16xi32, #tpu.memory_space<smem>>
      %c13_i32_183 = arith.constant 13 : i32
      %c0_i32_184 = arith.constant 0 : i32
      %292 = tpu.memref_slice %arg2[%291, %c0_i32_184] : memref<512x256xf32, #tpu.memory_space<any>> -> memref<1x256xf32, #tpu.memory_space<any>>
      %c13_i32_185 = arith.constant 13 : i32
      %c0_i32_186 = arith.constant 0 : i32
      %293 = tpu.memref_slice %arg4[%1, %c13_i32_185, %c0_i32_186] : memref<2x16x256xf32, #tpu.memory_space<vmem>> -> memref<1x1x256xf32, #tpu.memory_space<vmem>>
      %294 = tpu.memref_squeeze %293 : memref<1x1x256xf32, #tpu.memory_space<vmem>> -> memref<1x256xf32, #tpu.memory_space<vmem>>
      %295 = tpu.memref_slice %arg5[%1, %c13_i32_183] : memref<2x16x!tpu.dma_semaphore, #tpu.memory_space<semaphore_mem>> -> memref<1x1x!tpu.dma_semaphore, #tpu.memory_space<semaphore_mem>>
      %296 = tpu.memref_squeeze %295 : memref<1x1x!tpu.dma_semaphore, #tpu.memory_space<semaphore_mem>> -> memref<!tpu.dma_semaphore, #tpu.memory_space<semaphore_mem>>
      tpu.enqueue_dma source(%292 : memref<1x256xf32, #tpu.memory_space<any>>) target(%294 : memref<1x256xf32, #tpu.memory_space<vmem>>) target_semaphore(%296 : memref<!tpu.dma_semaphore, #tpu.memory_space<semaphore_mem>>)
      %c1_i32_187 = arith.constant 1 : i32
      %297 = arith.addi %arg0, %c1_i32_187 : i32
      %c16_i32_188 = arith.constant 16 : i32
      %298 = arith.muli %297, %c16_i32_188 : i32
      %c14_i32_189 = arith.constant 14 : i32
      %299 = arith.addi %298, %c14_i32_189 : i32
      %300 = arith.index_cast %299 : i32 to index
      %301 = memref.load %arg1[%300] : memref<16xi32, #tpu.memory_space<smem>>
      %c14_i32_190 = arith.constant 14 : i32
      %c0_i32_191 = arith.constant 0 : i32
      %302 = tpu.memref_slice %arg2[%301, %c0_i32_191] : memref<512x256xf32, #tpu.memory_space<any>> -> memref<1x256xf32, #tpu.memory_space<any>>
      %c14_i32_192 = arith.constant 14 : i32
      %c0_i32_193 = arith.constant 0 : i32
      %303 = tpu.memref_slice %arg4[%1, %c14_i32_192, %c0_i32_193] : memref<2x16x256xf32, #tpu.memory_space<vmem>> -> memref<1x1x256xf32, #tpu.memory_space<vmem>>
      %304 = tpu.memref_squeeze %303 : memref<1x1x256xf32, #tpu.memory_space<vmem>> -> memref<1x256xf32, #tpu.memory_space<vmem>>
      %305 = tpu.memref_slice %arg5[%1, %c14_i32_190] : memref<2x16x!tpu.dma_semaphore, #tpu.memory_space<semaphore_mem>> -> memref<1x1x!tpu.dma_semaphore, #tpu.memory_space<semaphore_mem>>
      %306 = tpu.memref_squeeze %305 : memref<1x1x!tpu.dma_semaphore, #tpu.memory_space<semaphore_mem>> -> memref<!tpu.dma_semaphore, #tpu.memory_space<semaphore_mem>>
      tpu.enqueue_dma source(%302 : memref<1x256xf32, #tpu.memory_space<any>>) target(%304 : memref<1x256xf32, #tpu.memory_space<vmem>>) target_semaphore(%306 : memref<!tpu.dma_semaphore, #tpu.memory_space<semaphore_mem>>)
      %c1_i32_194 = arith.constant 1 : i32
      %307 = arith.addi %arg0, %c1_i32_194 : i32
      %c16_i32_195 = arith.constant 16 : i32
      %308 = arith.muli %307, %c16_i32_195 : i32
      %c15_i32_196 = arith.constant 15 : i32
      %309 = arith.addi %308, %c15_i32_196 : i32
      %310 = arith.index_cast %309 : i32 to index
      %311 = memref.load %arg1[%310] : memref<16xi32, #tpu.memory_space<smem>>
      %c15_i32_197 = arith.constant 15 : i32
      %c0_i32_198 = arith.constant 0 : i32
      %312 = tpu.memref_slice %arg2[%311, %c0_i32_198] : memref<512x256xf32, #tpu.memory_space<any>> -> memref<1x256xf32, #tpu.memory_space<any>>
      %c15_i32_199 = arith.constant 15 : i32
      %c0_i32_200 = arith.constant 0 : i32
      %313 = tpu.memref_slice %arg4[%1, %c15_i32_199, %c0_i32_200] : memref<2x16x256xf32, #tpu.memory_space<vmem>> -> memref<1x1x256xf32, #tpu.memory_space<vmem>>
      %314 = tpu.memref_squeeze %313 : memref<1x1x256xf32, #tpu.memory_space<vmem>> -> memref<1x256xf32, #tpu.memory_space<vmem>>
      %315 = tpu.memref_slice %arg5[%1, %c15_i32_197] : memref<2x16x!tpu.dma_semaphore, #tpu.memory_space<semaphore_mem>> -> memref<1x1x!tpu.dma_semaphore, #tpu.memory_space<semaphore_mem>>
      %316 = tpu.memref_squeeze %315 : memref<1x1x!tpu.dma_semaphore, #tpu.memory_space<semaphore_mem>> -> memref<!tpu.dma_semaphore, #tpu.memory_space<semaphore_mem>>
      tpu.enqueue_dma source(%312 : memref<1x256xf32, #tpu.memory_space<any>>) target(%314 : memref<1x256xf32, #tpu.memory_space<vmem>>) target_semaphore(%316 : memref<!tpu.dma_semaphore, #tpu.memory_space<semaphore_mem>>)
    } else {
    }
    %c16_i32 = arith.constant 16 : i32
    %9 = arith.muli %arg0, %c16_i32 : i32
    %c0_i32_5 = arith.constant 0 : i32
    %10 = arith.addi %9, %c0_i32_5 : i32
    %11 = arith.index_cast %10 : i32 to index
    %12 = memref.load %arg1[%11] : memref<16xi32, #tpu.memory_space<smem>>
    %c0_i32_6 = arith.constant 0 : i32
    %c0_i32_7 = arith.constant 0 : i32
    %13 = tpu.memref_slice %arg2[%12, %c0_i32_7] : memref<512x256xf32, #tpu.memory_space<any>> -> memref<1x256xf32, #tpu.memory_space<any>>
    %c0_i32_8 = arith.constant 0 : i32
    %c0_i32_9 = arith.constant 0 : i32
    %14 = tpu.memref_slice %arg4[%0, %c0_i32_8, %c0_i32_9] : memref<2x16x256xf32, #tpu.memory_space<vmem>> -> memref<1x1x256xf32, #tpu.memory_space<vmem>>
    %15 = tpu.memref_squeeze %14 : memref<1x1x256xf32, #tpu.memory_space<vmem>> -> memref<1x256xf32, #tpu.memory_space<vmem>>
    %16 = tpu.memref_slice %arg5[%0, %c0_i32_6] : memref<2x16x!tpu.dma_semaphore, #tpu.memory_space<semaphore_mem>> -> memref<1x1x!tpu.dma_semaphore, #tpu.memory_space<semaphore_mem>>
    %17 = tpu.memref_squeeze %16 : memref<1x1x!tpu.dma_semaphore, #tpu.memory_space<semaphore_mem>> -> memref<!tpu.dma_semaphore, #tpu.memory_space<semaphore_mem>>
    tpu.wait_dma2 semaphore(%17 : memref<!tpu.dma_semaphore, #tpu.memory_space<semaphore_mem>>) src(%13 : memref<1x256xf32, #tpu.memory_space<any>>) dst(%15 : memref<1x256xf32, #tpu.memory_space<vmem>>)
    %c16_i32_10 = arith.constant 16 : i32
    %18 = arith.muli %arg0, %c16_i32_10 : i32
    %c1_i32_11 = arith.constant 1 : i32
    %19 = arith.addi %18, %c1_i32_11 : i32
    %20 = arith.index_cast %19 : i32 to index
    %21 = memref.load %arg1[%20] : memref<16xi32, #tpu.memory_space<smem>>
    %c1_i32_12 = arith.constant 1 : i32
    %c0_i32_13 = arith.constant 0 : i32
    %22 = tpu.memref_slice %arg2[%21, %c0_i32_13] : memref<512x256xf32, #tpu.memory_space<any>> -> memref<1x256xf32, #tpu.memory_space<any>>
    %c1_i32_14 = arith.constant 1 : i32
    %c0_i32_15 = arith.constant 0 : i32
    %23 = tpu.memref_slice %arg4[%0, %c1_i32_14, %c0_i32_15] : memref<2x16x256xf32, #tpu.memory_space<vmem>> -> memref<1x1x256xf32, #tpu.memory_space<vmem>>
    %24 = tpu.memref_squeeze %23 : memref<1x1x256xf32, #tpu.memory_space<vmem>> -> memref<1x256xf32, #tpu.memory_space<vmem>>
    %25 = tpu.memref_slice %arg5[%0, %c1_i32_12] : memref<2x16x!tpu.dma_semaphore, #tpu.memory_space<semaphore_mem>> -> memref<1x1x!tpu.dma_semaphore, #tpu.memory_space<semaphore_mem>>
    %26 = tpu.memref_squeeze %25 : memref<1x1x!tpu.dma_semaphore, #tpu.memory_space<semaphore_mem>> -> memref<!tpu.dma_semaphore, #tpu.memory_space<semaphore_mem>>
    tpu.wait_dma2 semaphore(%26 : memref<!tpu.dma_semaphore, #tpu.memory_space<semaphore_mem>>) src(%22 : memref<1x256xf32, #tpu.memory_space<any>>) dst(%24 : memref<1x256xf32, #tpu.memory_space<vmem>>)
    %c16_i32_16 = arith.constant 16 : i32
    %27 = arith.muli %arg0, %c16_i32_16 : i32
    %c2_i32 = arith.constant 2 : i32
    %28 = arith.addi %27, %c2_i32 : i32
    %29 = arith.index_cast %28 : i32 to index
    %30 = memref.load %arg1[%29] : memref<16xi32, #tpu.memory_space<smem>>
    %c2_i32_17 = arith.constant 2 : i32
    %c0_i32_18 = arith.constant 0 : i32
    %31 = tpu.memref_slice %arg2[%30, %c0_i32_18] : memref<512x256xf32, #tpu.memory_space<any>> -> memref<1x256xf32, #tpu.memory_space<any>>
    %c2_i32_19 = arith.constant 2 : i32
    %c0_i32_20 = arith.constant 0 : i32
    %32 = tpu.memref_slice %arg4[%0, %c2_i32_19, %c0_i32_20] : memref<2x16x256xf32, #tpu.memory_space<vmem>> -> memref<1x1x256xf32, #tpu.memory_space<vmem>>
    %33 = tpu.memref_squeeze %32 : memref<1x1x256xf32, #tpu.memory_space<vmem>> -> memref<1x256xf32, #tpu.memory_space<vmem>>
    %34 = tpu.memref_slice %arg5[%0, %c2_i32_17] : memref<2x16x!tpu.dma_semaphore, #tpu.memory_space<semaphore_mem>> -> memref<1x1x!tpu.dma_semaphore, #tpu.memory_space<semaphore_mem>>
    %35 = tpu.memref_squeeze %34 : memref<1x1x!tpu.dma_semaphore, #tpu.memory_space<semaphore_mem>> -> memref<!tpu.dma_semaphore, #tpu.memory_space<semaphore_mem>>
    tpu.wait_dma2 semaphore(%35 : memref<!tpu.dma_semaphore, #tpu.memory_space<semaphore_mem>>) src(%31 : memref<1x256xf32, #tpu.memory_space<any>>) dst(%33 : memref<1x256xf32, #tpu.memory_space<vmem>>)
    %c16_i32_21 = arith.constant 16 : i32
    %36 = arith.muli %arg0, %c16_i32_21 : i32
    %c3_i32 = arith.constant 3 : i32
    %37 = arith.addi %36, %c3_i32 : i32
    %38 = arith.index_cast %37 : i32 to index
    %39 = memref.load %arg1[%38] : memref<16xi32, #tpu.memory_space<smem>>
    %c3_i32_22 = arith.constant 3 : i32
    %c0_i32_23 = arith.constant 0 : i32
    %40 = tpu.memref_slice %arg2[%39, %c0_i32_23] : memref<512x256xf32, #tpu.memory_space<any>> -> memref<1x256xf32, #tpu.memory_space<any>>
    %c3_i32_24 = arith.constant 3 : i32
    %c0_i32_25 = arith.constant 0 : i32
    %41 = tpu.memref_slice %arg4[%0, %c3_i32_24, %c0_i32_25] : memref<2x16x256xf32, #tpu.memory_space<vmem>> -> memref<1x1x256xf32, #tpu.memory_space<vmem>>
    %42 = tpu.memref_squeeze %41 : memref<1x1x256xf32, #tpu.memory_space<vmem>> -> memref<1x256xf32, #tpu.memory_space<vmem>>
    %43 = tpu.memref_slice %arg5[%0, %c3_i32_22] : memref<2x16x!tpu.dma_semaphore, #tpu.memory_space<semaphore_mem>> -> memref<1x1x!tpu.dma_semaphore, #tpu.memory_space<semaphore_mem>>
    %44 = tpu.memref_squeeze %43 : memref<1x1x!tpu.dma_semaphore, #tpu.memory_space<semaphore_mem>> -> memref<!tpu.dma_semaphore, #tpu.memory_space<semaphore_mem>>
    tpu.wait_dma2 semaphore(%44 : memref<!tpu.dma_semaphore, #tpu.memory_space<semaphore_mem>>) src(%40 : memref<1x256xf32, #tpu.memory_space<any>>) dst(%42 : memref<1x256xf32, #tpu.memory_space<vmem>>)
    %c16_i32_26 = arith.constant 16 : i32
    %45 = arith.muli %arg0, %c16_i32_26 : i32
    %c4_i32 = arith.constant 4 : i32
    %46 = arith.addi %45, %c4_i32 : i32
    %47 = arith.index_cast %46 : i32 to index
    %48 = memref.load %arg1[%47] : memref<16xi32, #tpu.memory_space<smem>>
    %c4_i32_27 = arith.constant 4 : i32
    %c0_i32_28 = arith.constant 0 : i32
    %49 = tpu.memref_slice %arg2[%48, %c0_i32_28] : memref<512x256xf32, #tpu.memory_space<any>> -> memref<1x256xf32, #tpu.memory_space<any>>
    %c4_i32_29 = arith.constant 4 : i32
    %c0_i32_30 = arith.constant 0 : i32
    %50 = tpu.memref_slice %arg4[%0, %c4_i32_29, %c0_i32_30] : memref<2x16x256xf32, #tpu.memory_space<vmem>> -> memref<1x1x256xf32, #tpu.memory_space<vmem>>
    %51 = tpu.memref_squeeze %50 : memref<1x1x256xf32, #tpu.memory_space<vmem>> -> memref<1x256xf32, #tpu.memory_space<vmem>>
    %52 = tpu.memref_slice %arg5[%0, %c4_i32_27] : memref<2x16x!tpu.dma_semaphore, #tpu.memory_space<semaphore_mem>> -> memref<1x1x!tpu.dma_semaphore, #tpu.memory_space<semaphore_mem>>
    %53 = tpu.memref_squeeze %52 : memref<1x1x!tpu.dma_semaphore, #tpu.memory_space<semaphore_mem>> -> memref<!tpu.dma_semaphore, #tpu.memory_space<semaphore_mem>>
    tpu.wait_dma2 semaphore(%53 : memref<!tpu.dma_semaphore, #tpu.memory_space<semaphore_mem>>) src(%49 : memref<1x256xf32, #tpu.memory_space<any>>) dst(%51 : memref<1x256xf32, #tpu.memory_space<vmem>>)
    %c16_i32_31 = arith.constant 16 : i32
    %54 = arith.muli %arg0, %c16_i32_31 : i32
    %c5_i32 = arith.constant 5 : i32
    %55 = arith.addi %54, %c5_i32 : i32
    %56 = arith.index_cast %55 : i32 to index
    %57 = memref.load %arg1[%56] : memref<16xi32, #tpu.memory_space<smem>>
    %c5_i32_32 = arith.constant 5 : i32
    %c0_i32_33 = arith.constant 0 : i32
    %58 = tpu.memref_slice %arg2[%57, %c0_i32_33] : memref<512x256xf32, #tpu.memory_space<any>> -> memref<1x256xf32, #tpu.memory_space<any>>
    %c5_i32_34 = arith.constant 5 : i32
    %c0_i32_35 = arith.constant 0 : i32
    %59 = tpu.memref_slice %arg4[%0, %c5_i32_34, %c0_i32_35] : memref<2x16x256xf32, #tpu.memory_space<vmem>> -> memref<1x1x256xf32, #tpu.memory_space<vmem>>
    %60 = tpu.memref_squeeze %59 : memref<1x1x256xf32, #tpu.memory_space<vmem>> -> memref<1x256xf32, #tpu.memory_space<vmem>>
    %61 = tpu.memref_slice %arg5[%0, %c5_i32_32] : memref<2x16x!tpu.dma_semaphore, #tpu.memory_space<semaphore_mem>> -> memref<1x1x!tpu.dma_semaphore, #tpu.memory_space<semaphore_mem>>
    %62 = tpu.memref_squeeze %61 : memref<1x1x!tpu.dma_semaphore, #tpu.memory_space<semaphore_mem>> -> memref<!tpu.dma_semaphore, #tpu.memory_space<semaphore_mem>>
    tpu.wait_dma2 semaphore(%62 : memref<!tpu.dma_semaphore, #tpu.memory_space<semaphore_mem>>) src(%58 : memref<1x256xf32, #tpu.memory_space<any>>) dst(%60 : memref<1x256xf32, #tpu.memory_space<vmem>>)
    %c16_i32_36 = arith.constant 16 : i32
    %63 = arith.muli %arg0, %c16_i32_36 : i32
    %c6_i32 = arith.constant 6 : i32
    %64 = arith.addi %63, %c6_i32 : i32
    %65 = arith.index_cast %64 : i32 to index
    %66 = memref.load %arg1[%65] : memref<16xi32, #tpu.memory_space<smem>>
    %c6_i32_37 = arith.constant 6 : i32
    %c0_i32_38 = arith.constant 0 : i32
    %67 = tpu.memref_slice %arg2[%66, %c0_i32_38] : memref<512x256xf32, #tpu.memory_space<any>> -> memref<1x256xf32, #tpu.memory_space<any>>
    %c6_i32_39 = arith.constant 6 : i32
    %c0_i32_40 = arith.constant 0 : i32
    %68 = tpu.memref_slice %arg4[%0, %c6_i32_39, %c0_i32_40] : memref<2x16x256xf32, #tpu.memory_space<vmem>> -> memref<1x1x256xf32, #tpu.memory_space<vmem>>
    %69 = tpu.memref_squeeze %68 : memref<1x1x256xf32, #tpu.memory_space<vmem>> -> memref<1x256xf32, #tpu.memory_space<vmem>>
    %70 = tpu.memref_slice %arg5[%0, %c6_i32_37] : memref<2x16x!tpu.dma_semaphore, #tpu.memory_space<semaphore_mem>> -> memref<1x1x!tpu.dma_semaphore, #tpu.memory_space<semaphore_mem>>
    %71 = tpu.memref_squeeze %70 : memref<1x1x!tpu.dma_semaphore, #tpu.memory_space<semaphore_mem>> -> memref<!tpu.dma_semaphore, #tpu.memory_space<semaphore_mem>>
    tpu.wait_dma2 semaphore(%71 : memref<!tpu.dma_semaphore, #tpu.memory_space<semaphore_mem>>) src(%67 : memref<1x256xf32, #tpu.memory_space<any>>) dst(%69 : memref<1x256xf32, #tpu.memory_space<vmem>>)
    %c16_i32_41 = arith.constant 16 : i32
    %72 = arith.muli %arg0, %c16_i32_41 : i32
    %c7_i32 = arith.constant 7 : i32
    %73 = arith.addi %72, %c7_i32 : i32
    %74 = arith.index_cast %73 : i32 to index
    %75 = memref.load %arg1[%74] : memref<16xi32, #tpu.memory_space<smem>>
    %c7_i32_42 = arith.constant 7 : i32
    %c0_i32_43 = arith.constant 0 : i32
    %76 = tpu.memref_slice %arg2[%75, %c0_i32_43] : memref<512x256xf32, #tpu.memory_space<any>> -> memref<1x256xf32, #tpu.memory_space<any>>
    %c7_i32_44 = arith.constant 7 : i32
    %c0_i32_45 = arith.constant 0 : i32
    %77 = tpu.memref_slice %arg4[%0, %c7_i32_44, %c0_i32_45] : memref<2x16x256xf32, #tpu.memory_space<vmem>> -> memref<1x1x256xf32, #tpu.memory_space<vmem>>
    %78 = tpu.memref_squeeze %77 : memref<1x1x256xf32, #tpu.memory_space<vmem>> -> memref<1x256xf32, #tpu.memory_space<vmem>>
    %79 = tpu.memref_slice %arg5[%0, %c7_i32_42] : memref<2x16x!tpu.dma_semaphore, #tpu.memory_space<semaphore_mem>> -> memref<1x1x!tpu.dma_semaphore, #tpu.memory_space<semaphore_mem>>
    %80 = tpu.memref_squeeze %79 : memref<1x1x!tpu.dma_semaphore, #tpu.memory_space<semaphore_mem>> -> memref<!tpu.dma_semaphore, #tpu.memory_space<semaphore_mem>>
    tpu.wait_dma2 semaphore(%80 : memref<!tpu.dma_semaphore, #tpu.memory_space<semaphore_mem>>) src(%76 : memref<1x256xf32, #tpu.memory_space<any>>) dst(%78 : memref<1x256xf32, #tpu.memory_space<vmem>>)
    %c16_i32_46 = arith.constant 16 : i32
    %81 = arith.muli %arg0, %c16_i32_46 : i32
    %c8_i32 = arith.constant 8 : i32
    %82 = arith.addi %81, %c8_i32 : i32
    %83 = arith.index_cast %82 : i32 to index
    %84 = memref.load %arg1[%83] : memref<16xi32, #tpu.memory_space<smem>>
    %c8_i32_47 = arith.constant 8 : i32
    %c0_i32_48 = arith.constant 0 : i32
    %85 = tpu.memref_slice %arg2[%84, %c0_i32_48] : memref<512x256xf32, #tpu.memory_space<any>> -> memref<1x256xf32, #tpu.memory_space<any>>
    %c8_i32_49 = arith.constant 8 : i32
    %c0_i32_50 = arith.constant 0 : i32
    %86 = tpu.memref_slice %arg4[%0, %c8_i32_49, %c0_i32_50] : memref<2x16x256xf32, #tpu.memory_space<vmem>> -> memref<1x1x256xf32, #tpu.memory_space<vmem>>
    %87 = tpu.memref_squeeze %86 : memref<1x1x256xf32, #tpu.memory_space<vmem>> -> memref<1x256xf32, #tpu.memory_space<vmem>>
    %88 = tpu.memref_slice %arg5[%0, %c8_i32_47] : memref<2x16x!tpu.dma_semaphore, #tpu.memory_space<semaphore_mem>> -> memref<1x1x!tpu.dma_semaphore, #tpu.memory_space<semaphore_mem>>
    %89 = tpu.memref_squeeze %88 : memref<1x1x!tpu.dma_semaphore, #tpu.memory_space<semaphore_mem>> -> memref<!tpu.dma_semaphore, #tpu.memory_space<semaphore_mem>>
    tpu.wait_dma2 semaphore(%89 : memref<!tpu.dma_semaphore, #tpu.memory_space<semaphore_mem>>) src(%85 : memref<1x256xf32, #tpu.memory_space<any>>) dst(%87 : memref<1x256xf32, #tpu.memory_space<vmem>>)
    %c16_i32_51 = arith.constant 16 : i32
    %90 = arith.muli %arg0, %c16_i32_51 : i32
    %c9_i32 = arith.constant 9 : i32
    %91 = arith.addi %90, %c9_i32 : i32
    %92 = arith.index_cast %91 : i32 to index
    %93 = memref.load %arg1[%92] : memref<16xi32, #tpu.memory_space<smem>>
    %c9_i32_52 = arith.constant 9 : i32
    %c0_i32_53 = arith.constant 0 : i32
    %94 = tpu.memref_slice %arg2[%93, %c0_i32_53] : memref<512x256xf32, #tpu.memory_space<any>> -> memref<1x256xf32, #tpu.memory_space<any>>
    %c9_i32_54 = arith.constant 9 : i32
    %c0_i32_55 = arith.constant 0 : i32
    %95 = tpu.memref_slice %arg4[%0, %c9_i32_54, %c0_i32_55] : memref<2x16x256xf32, #tpu.memory_space<vmem>> -> memref<1x1x256xf32, #tpu.memory_space<vmem>>
    %96 = tpu.memref_squeeze %95 : memref<1x1x256xf32, #tpu.memory_space<vmem>> -> memref<1x256xf32, #tpu.memory_space<vmem>>
    %97 = tpu.memref_slice %arg5[%0, %c9_i32_52] : memref<2x16x!tpu.dma_semaphore, #tpu.memory_space<semaphore_mem>> -> memref<1x1x!tpu.dma_semaphore, #tpu.memory_space<semaphore_mem>>
    %98 = tpu.memref_squeeze %97 : memref<1x1x!tpu.dma_semaphore, #tpu.memory_space<semaphore_mem>> -> memref<!tpu.dma_semaphore, #tpu.memory_space<semaphore_mem>>
    tpu.wait_dma2 semaphore(%98 : memref<!tpu.dma_semaphore, #tpu.memory_space<semaphore_mem>>) src(%94 : memref<1x256xf32, #tpu.memory_space<any>>) dst(%96 : memref<1x256xf32, #tpu.memory_space<vmem>>)
    %c16_i32_56 = arith.constant 16 : i32
    %99 = arith.muli %arg0, %c16_i32_56 : i32
    %c10_i32 = arith.constant 10 : i32
    %100 = arith.addi %99, %c10_i32 : i32
    %101 = arith.index_cast %100 : i32 to index
    %102 = memref.load %arg1[%101] : memref<16xi32, #tpu.memory_space<smem>>
    %c10_i32_57 = arith.constant 10 : i32
    %c0_i32_58 = arith.constant 0 : i32
    %103 = tpu.memref_slice %arg2[%102, %c0_i32_58] : memref<512x256xf32, #tpu.memory_space<any>> -> memref<1x256xf32, #tpu.memory_space<any>>
    %c10_i32_59 = arith.constant 10 : i32
    %c0_i32_60 = arith.constant 0 : i32
    %104 = tpu.memref_slice %arg4[%0, %c10_i32_59, %c0_i32_60] : memref<2x16x256xf32, #tpu.memory_space<vmem>> -> memref<1x1x256xf32, #tpu.memory_space<vmem>>
    %105 = tpu.memref_squeeze %104 : memref<1x1x256xf32, #tpu.memory_space<vmem>> -> memref<1x256xf32, #tpu.memory_space<vmem>>
    %106 = tpu.memref_slice %arg5[%0, %c10_i32_57] : memref<2x16x!tpu.dma_semaphore, #tpu.memory_space<semaphore_mem>> -> memref<1x1x!tpu.dma_semaphore, #tpu.memory_space<semaphore_mem>>
    %107 = tpu.memref_squeeze %106 : memref<1x1x!tpu.dma_semaphore, #tpu.memory_space<semaphore_mem>> -> memref<!tpu.dma_semaphore, #tpu.memory_space<semaphore_mem>>
    tpu.wait_dma2 semaphore(%107 : memref<!tpu.dma_semaphore, #tpu.memory_space<semaphore_mem>>) src(%103 : memref<1x256xf32, #tpu.memory_space<any>>) dst(%105 : memref<1x256xf32, #tpu.memory_space<vmem>>)
    %c16_i32_61 = arith.constant 16 : i32
    %108 = arith.muli %arg0, %c16_i32_61 : i32
    %c11_i32 = arith.constant 11 : i32
    %109 = arith.addi %108, %c11_i32 : i32
    %110 = arith.index_cast %109 : i32 to index
    %111 = memref.load %arg1[%110] : memref<16xi32, #tpu.memory_space<smem>>
    %c11_i32_62 = arith.constant 11 : i32
    %c0_i32_63 = arith.constant 0 : i32
    %112 = tpu.memref_slice %arg2[%111, %c0_i32_63] : memref<512x256xf32, #tpu.memory_space<any>> -> memref<1x256xf32, #tpu.memory_space<any>>
    %c11_i32_64 = arith.constant 11 : i32
    %c0_i32_65 = arith.constant 0 : i32
    %113 = tpu.memref_slice %arg4[%0, %c11_i32_64, %c0_i32_65] : memref<2x16x256xf32, #tpu.memory_space<vmem>> -> memref<1x1x256xf32, #tpu.memory_space<vmem>>
    %114 = tpu.memref_squeeze %113 : memref<1x1x256xf32, #tpu.memory_space<vmem>> -> memref<1x256xf32, #tpu.memory_space<vmem>>
    %115 = tpu.memref_slice %arg5[%0, %c11_i32_62] : memref<2x16x!tpu.dma_semaphore, #tpu.memory_space<semaphore_mem>> -> memref<1x1x!tpu.dma_semaphore, #tpu.memory_space<semaphore_mem>>
    %116 = tpu.memref_squeeze %115 : memref<1x1x!tpu.dma_semaphore, #tpu.memory_space<semaphore_mem>> -> memref<!tpu.dma_semaphore, #tpu.memory_space<semaphore_mem>>
    tpu.wait_dma2 semaphore(%116 : memref<!tpu.dma_semaphore, #tpu.memory_space<semaphore_mem>>) src(%112 : memref<1x256xf32, #tpu.memory_space<any>>) dst(%114 : memref<1x256xf32, #tpu.memory_space<vmem>>)
    %c16_i32_66 = arith.constant 16 : i32
    %117 = arith.muli %arg0, %c16_i32_66 : i32
    %c12_i32 = arith.constant 12 : i32
    %118 = arith.addi %117, %c12_i32 : i32
    %119 = arith.index_cast %118 : i32 to index
    %120 = memref.load %arg1[%119] : memref<16xi32, #tpu.memory_space<smem>>
    %c12_i32_67 = arith.constant 12 : i32
    %c0_i32_68 = arith.constant 0 : i32
    %121 = tpu.memref_slice %arg2[%120, %c0_i32_68] : memref<512x256xf32, #tpu.memory_space<any>> -> memref<1x256xf32, #tpu.memory_space<any>>
    %c12_i32_69 = arith.constant 12 : i32
    %c0_i32_70 = arith.constant 0 : i32
    %122 = tpu.memref_slice %arg4[%0, %c12_i32_69, %c0_i32_70] : memref<2x16x256xf32, #tpu.memory_space<vmem>> -> memref<1x1x256xf32, #tpu.memory_space<vmem>>
    %123 = tpu.memref_squeeze %122 : memref<1x1x256xf32, #tpu.memory_space<vmem>> -> memref<1x256xf32, #tpu.memory_space<vmem>>
    %124 = tpu.memref_slice %arg5[%0, %c12_i32_67] : memref<2x16x!tpu.dma_semaphore, #tpu.memory_space<semaphore_mem>> -> memref<1x1x!tpu.dma_semaphore, #tpu.memory_space<semaphore_mem>>
    %125 = tpu.memref_squeeze %124 : memref<1x1x!tpu.dma_semaphore, #tpu.memory_space<semaphore_mem>> -> memref<!tpu.dma_semaphore, #tpu.memory_space<semaphore_mem>>
    tpu.wait_dma2 semaphore(%125 : memref<!tpu.dma_semaphore, #tpu.memory_space<semaphore_mem>>) src(%121 : memref<1x256xf32, #tpu.memory_space<any>>) dst(%123 : memref<1x256xf32, #tpu.memory_space<vmem>>)
    %c16_i32_71 = arith.constant 16 : i32
    %126 = arith.muli %arg0, %c16_i32_71 : i32
    %c13_i32 = arith.constant 13 : i32
    %127 = arith.addi %126, %c13_i32 : i32
    %128 = arith.index_cast %127 : i32 to index
    %129 = memref.load %arg1[%128] : memref<16xi32, #tpu.memory_space<smem>>
    %c13_i32_72 = arith.constant 13 : i32
    %c0_i32_73 = arith.constant 0 : i32
    %130 = tpu.memref_slice %arg2[%129, %c0_i32_73] : memref<512x256xf32, #tpu.memory_space<any>> -> memref<1x256xf32, #tpu.memory_space<any>>
    %c13_i32_74 = arith.constant 13 : i32
    %c0_i32_75 = arith.constant 0 : i32
    %131 = tpu.memref_slice %arg4[%0, %c13_i32_74, %c0_i32_75] : memref<2x16x256xf32, #tpu.memory_space<vmem>> -> memref<1x1x256xf32, #tpu.memory_space<vmem>>
    %132 = tpu.memref_squeeze %131 : memref<1x1x256xf32, #tpu.memory_space<vmem>> -> memref<1x256xf32, #tpu.memory_space<vmem>>
    %133 = tpu.memref_slice %arg5[%0, %c13_i32_72] : memref<2x16x!tpu.dma_semaphore, #tpu.memory_space<semaphore_mem>> -> memref<1x1x!tpu.dma_semaphore, #tpu.memory_space<semaphore_mem>>
    %134 = tpu.memref_squeeze %133 : memref<1x1x!tpu.dma_semaphore, #tpu.memory_space<semaphore_mem>> -> memref<!tpu.dma_semaphore, #tpu.memory_space<semaphore_mem>>
    tpu.wait_dma2 semaphore(%134 : memref<!tpu.dma_semaphore, #tpu.memory_space<semaphore_mem>>) src(%130 : memref<1x256xf32, #tpu.memory_space<any>>) dst(%132 : memref<1x256xf32, #tpu.memory_space<vmem>>)
    %c16_i32_76 = arith.constant 16 : i32
    %135 = arith.muli %arg0, %c16_i32_76 : i32
    %c14_i32 = arith.constant 14 : i32
    %136 = arith.addi %135, %c14_i32 : i32
    %137 = arith.index_cast %136 : i32 to index
    %138 = memref.load %arg1[%137] : memref<16xi32, #tpu.memory_space<smem>>
    %c14_i32_77 = arith.constant 14 : i32
    %c0_i32_78 = arith.constant 0 : i32
    %139 = tpu.memref_slice %arg2[%138, %c0_i32_78] : memref<512x256xf32, #tpu.memory_space<any>> -> memref<1x256xf32, #tpu.memory_space<any>>
    %c14_i32_79 = arith.constant 14 : i32
    %c0_i32_80 = arith.constant 0 : i32
    %140 = tpu.memref_slice %arg4[%0, %c14_i32_79, %c0_i32_80] : memref<2x16x256xf32, #tpu.memory_space<vmem>> -> memref<1x1x256xf32, #tpu.memory_space<vmem>>
    %141 = tpu.memref_squeeze %140 : memref<1x1x256xf32, #tpu.memory_space<vmem>> -> memref<1x256xf32, #tpu.memory_space<vmem>>
    %142 = tpu.memref_slice %arg5[%0, %c14_i32_77] : memref<2x16x!tpu.dma_semaphore, #tpu.memory_space<semaphore_mem>> -> memref<1x1x!tpu.dma_semaphore, #tpu.memory_space<semaphore_mem>>
    %143 = tpu.memref_squeeze %142 : memref<1x1x!tpu.dma_semaphore, #tpu.memory_space<semaphore_mem>> -> memref<!tpu.dma_semaphore, #tpu.memory_space<semaphore_mem>>
    tpu.wait_dma2 semaphore(%143 : memref<!tpu.dma_semaphore, #tpu.memory_space<semaphore_mem>>) src(%139 : memref<1x256xf32, #tpu.memory_space<any>>) dst(%141 : memref<1x256xf32, #tpu.memory_space<vmem>>)
    %c16_i32_81 = arith.constant 16 : i32
    %144 = arith.muli %arg0, %c16_i32_81 : i32
    %c15_i32 = arith.constant 15 : i32
    %145 = arith.addi %144, %c15_i32 : i32
    %146 = arith.index_cast %145 : i32 to index
    %147 = memref.load %arg1[%146] : memref<16xi32, #tpu.memory_space<smem>>
    %c15_i32_82 = arith.constant 15 : i32
    %c0_i32_83 = arith.constant 0 : i32
    %148 = tpu.memref_slice %arg2[%147, %c0_i32_83] : memref<512x256xf32, #tpu.memory_space<any>> -> memref<1x256xf32, #tpu.memory_space<any>>
    %c15_i32_84 = arith.constant 15 : i32
    %c0_i32_85 = arith.constant 0 : i32
    %149 = tpu.memref_slice %arg4[%0, %c15_i32_84, %c0_i32_85] : memref<2x16x256xf32, #tpu.memory_space<vmem>> -> memref<1x1x256xf32, #tpu.memory_space<vmem>>
    %150 = tpu.memref_squeeze %149 : memref<1x1x256xf32, #tpu.memory_space<vmem>> -> memref<1x256xf32, #tpu.memory_space<vmem>>
    %151 = tpu.memref_slice %arg5[%0, %c15_i32_82] : memref<2x16x!tpu.dma_semaphore, #tpu.memory_space<semaphore_mem>> -> memref<1x1x!tpu.dma_semaphore, #tpu.memory_space<semaphore_mem>>
    %152 = tpu.memref_squeeze %151 : memref<1x1x!tpu.dma_semaphore, #tpu.memory_space<semaphore_mem>> -> memref<!tpu.dma_semaphore, #tpu.memory_space<semaphore_mem>>
    tpu.wait_dma2 semaphore(%152 : memref<!tpu.dma_semaphore, #tpu.memory_space<semaphore_mem>>) src(%148 : memref<1x256xf32, #tpu.memory_space<any>>) dst(%150 : memref<1x256xf32, #tpu.memory_space<vmem>>)
    %153 = arith.index_cast %0 : i32 to index
    %c0 = arith.constant 0 : index
    %c0_86 = arith.constant 0 : index
    %154 = vector.load %arg4[%153, %c0, %c0_86] : memref<2x16x256xf32, #tpu.memory_space<vmem>>, vector<1x16x256xf32>
    %155 = vector.shape_cast %154 : vector<1x16x256xf32> to vector<16x256xf32>
    %c0_87 = arith.constant 0 : index
    %c0_88 = arith.constant 0 : index
    %156 = vector.load %arg3[%c0_87, %c0_88] : memref<16x256xf32, #tpu.memory_space<vmem>>, vector<16x256xf32>
    tpu.vector_store %arg3[%c0_87, %c0_88], %155 {strides = array<i32>} : memref<16x256xf32, #tpu.memory_space<vmem>>, vector<16x256xf32>,
    return
  }
  func.func @transform_1(%arg0: i32, %arg1: memref<16xi32, #tpu.memory_space<smem>>) -> (i32, i32) {
    %c0_i32 = arith.constant 0 : i32
    %c0_i32_0 = arith.constant 0 : i32
    return %arg0, %c0_i32 : i32, i32
  }
}

</mosaic_0001>

<llo_original>
// kernel: tpu_custom_call.1
$region0: #{tpu_custom_call.1}
  #allocation0 [shape = 'u32[]', space=smem, size = 0x4, offset = 0x4, fixed_abs, tag = 'smem constant byte address 0x4 - core index']
  #allocation1 [shape = 'u32[144,128]{1,0:T(1,128)}', space=vmem, size = 0x12000, scoped, tag = 'internal scratch']
  #allocation2 [shape = 'f32[2,16,256]{2,1,0:T(8,128)}', space=vmem, size = 0x8000, scoped, tag = 'scratch operand']
  #allocation3 [shape = 's32[32]{0}', space=sflag, size = 0x80, scoped, tag = 'scratch operand']
  #allocation4 [shape = 's32[1]{0}', space=sflag, size = 0x4, scoped, tag = 'scoped memory for tpu_custom_call.1']
  #allocation5 [shape = 'u8[512]{0}', space=smem, size = 0x200, scoped, tag = 'prefetched SMEM operand 0']
  #allocation8 [shape = 's32[]', space=sflag, size = 0x4, offset = 0, fixed_abs, tag = 'sflag constant byte address 0x0 - dummy sync flag']
  #allocation9 [shape = 's32[]', space=sflag, size = 0x4, offset = 0, fixed_abs, tag = 'sflag constant byte address 0x0 - dummy sync flag']
  #allocation10 [shape = 's32[]', space=sflag, size = 0x4, offset = 0, fixed_abs, tag = 'sflag constant byte address 0x0 - dummy sync flag']
  #allocation11 [shape = 's32[]', space=sflag, size = 0x4, offset = 0, fixed_abs, tag = 'sflag constant byte address 0x0 - dummy sync flag']
  #allocation12 [shape = 's32[]', space=sflag, size = 0x4, offset = 0, fixed_abs, tag = 'sflag constant byte address 0x0 - dummy sync flag']
  #allocation13 [shape = 's32[]', space=sflag, size = 0x4, offset = 0, fixed_abs, tag = 'sflag constant byte address 0x0 - dummy sync flag']
  #allocation14 [shape = 's32[]', space=sflag, size = 0x4, offset = 0, fixed_abs, tag = 'sflag constant byte address 0x0 - dummy sync flag']
  #allocation15 [shape = 's32[]', space=sflag, size = 0x4, offset = 0, fixed_abs, tag = 'sflag constant byte address 0x0 - dummy sync flag']
  #allocation16 [shape = 's32[]', space=sflag, size = 0x4, offset = 0, fixed_abs, tag = 'sflag constant byte address 0x0 - dummy sync flag']
  #allocation17 [shape = 's32[]', space=sflag, size = 0x4, offset = 0, fixed_abs, tag = 'sflag constant byte address 0x0 - dummy sync flag']
  #allocation18 [shape = 's32[]', space=sflag, size = 0x4, offset = 0, fixed_abs, tag = 'sflag constant byte address 0x0 - dummy sync flag']
  #allocation19 [shape = 's32[]', space=sflag, size = 0x4, offset = 0, fixed_abs, tag = 'sflag constant byte address 0x0 - dummy sync flag']
  #allocation20 [shape = 's32[]', space=sflag, size = 0x4, offset = 0, fixed_abs, tag = 'sflag constant byte address 0x0 - dummy sync flag']
  #allocation21 [shape = 's32[]', space=sflag, size = 0x4, offset = 0, fixed_abs, tag = 'sflag constant byte address 0x0 - dummy sync flag']
  #allocation22 [shape = 's32[]', space=sflag, size = 0x4, offset = 0, fixed_abs, tag = 'sflag constant byte address 0x0 - dummy sync flag']
  #allocation23 [shape = 's32[]', space=sflag, size = 0x4, offset = 0, fixed_abs, tag = 'sflag constant byte address 0x0 - dummy sync flag']
  #allocation24 [shape = 's32[]', space=sflag, size = 0x4, offset = 0, fixed_abs, tag = 'sflag constant byte address 0x0 - dummy sync flag']
  #allocation25 [shape = 's32[]', space=sflag, size = 0x4, offset = 0, fixed_abs, tag = 'sflag constant byte address 0x0 - dummy sync flag']
  #allocation26 [shape = 's32[]', space=sflag, size = 0x4, offset = 0, fixed_abs, tag = 'sflag constant byte address 0x0 - dummy sync flag']
  #allocation27 [shape = 's32[]', space=sflag, size = 0x4, offset = 0, fixed_abs, tag = 'sflag constant byte address 0x0 - dummy sync flag']
  #allocation28 [shape = 's32[]', space=sflag, size = 0x4, offset = 0, fixed_abs, tag = 'sflag constant byte address 0x0 - dummy sync flag']
  #allocation29 [shape = 's32[]', space=sflag, size = 0x4, offset = 0, fixed_abs, tag = 'sflag constant byte address 0x0 - dummy sync flag']
  #allocation30 [shape = 's32[]', space=sflag, size = 0x4, offset = 0, fixed_abs, tag = 'sflag constant byte address 0x0 - dummy sync flag']
  #allocation31 [shape = 's32[]', space=sflag, size = 0x4, offset = 0, fixed_abs, tag = 'sflag constant byte address 0x0 - dummy sync flag']
  #allocation32 [shape = 's32[]', space=sflag, size = 0x4, offset = 0, fixed_abs, tag = 'sflag constant byte address 0x0 - dummy sync flag']
  #allocation33 [shape = 's32[]', space=sflag, size = 0x4, offset = 0, fixed_abs, tag = 'sflag constant byte address 0x0 - dummy sync flag']
  #allocation34 [shape = 's32[]', space=sflag, size = 0x4, offset = 0, fixed_abs, tag = 'sflag constant byte address 0x0 - dummy sync flag']
  #allocation35 [shape = 's32[]', space=sflag, size = 0x4, offset = 0, fixed_abs, tag = 'sflag constant byte address 0x0 - dummy sync flag']
  #allocation36 [shape = 's32[]', space=sflag, size = 0x4, offset = 0, fixed_abs, tag = 'sflag constant byte address 0x0 - dummy sync flag']
  #allocation37 [shape = 's32[]', space=sflag, size = 0x4, offset = 0, fixed_abs, tag = 'sflag constant byte address 0x0 - dummy sync flag']
  #allocation38 [shape = 's32[]', space=sflag, size = 0x4, offset = 0, fixed_abs, tag = 'sflag constant byte address 0x0 - dummy sync flag']
  #allocation39 [shape = 's32[]', space=sflag, size = 0x4, offset = 0, fixed_abs, tag = 'sflag constant byte address 0x0 - dummy sync flag']
  %s0 = inlined_call_operand.hbm [shape: s32[16], index: 0, kind: input, shape index: {}]
  %s1 = inlined_call_operand.hbm [shape: f32[512,256], index: 1, kind: input, shape index: {}]
  %s2 = inlined_call_operand.hbm [shape: f32[16,256], index: 2, kind: output, shape index: {}]
  %s3 = sld [smem:[#allocation0]]
  $region18: #{tpu_custom_call.1} parent=0
    _
  %s5 = ssub.s32 1, %s3
  %s6 = scalar_select 0, %s5, %s3
  %8 = dma.hbm_to_smem %s0, 16, [#allocation5], [#allocation4]
  %9 = dma.done [#allocation4], 16
  %10 = sfence
  $region1: #{tpu_custom_call.1} parent=0
    #allocation6 [shape = 'u8[16384]{0}', space=vmem, size = 0x4000, scoped, tag = 'output window, operand 0, single buffered']
    #allocation7 [shape = 's32[1]{0}', space=sflag, size = 0x4, scoped, tag = 'scoped memory for tpu_custom_call.1']
    %11 = vsyncpa [#allocation7], 0
    %s12 = sand.u32 0, 1
    %s13 = ssub.s32 1, %s12
    %p14 = scmp.eq.s32.totalorder 0, 0
    // Predicated region
    $region2: #{tpu_custom_call.1} parent=1 // pred_check
      %p15 = pneg %p14
    $region3: #{tpu_custom_call.1} parent=1 // pred_check_branch
      %17 = sbr.rel (%p15) target = $region5
    $region4: #{tpu_custom_call.1} parent=1 // pred_region
      %s18 = sld [smem:[#allocation5]]
      %s19 = sshrl.u32 %s18, 3
      %s20 = sand.u32 %s18, 7
      %s21 = smul.u32 %s19, 16
      %s22 = sadd.s32 %s20, %s21
      %s23 = smul.addr %s22, 16
      %s24 = scalar_lea.hbm %s1, %s23
      %s26 = sshll.u32 [#allocation2], 4
      %s27 = int_to_ptr.vmem [resolvable:$true] %s26
      %29 = dma.hbm_to_vmem [thread:$0]  %s24, 32, %s27, [#allocation3], 128, 128, 1
      %s30 = sld [smem:[#allocation5 + $0x1]]
      %s31 = sshrl.u32 %s30, 3
      %s32 = sand.u32 %s30, 7
      %s33 = smul.u32 %s31, 16
      %s34 = sadd.s32 %s32, %s33
      %s35 = smul.addr %s34, 16
      %s36 = scalar_lea.hbm %s1, %s35
      %s37 = scalar_lea.vmem [#allocation2], 1
      %s38 = scalar_lea.sflag [#allocation3], 1
      %s40 = sshll.u32 %s37, 4
      %s41 = int_to_ptr.vmem [resolvable:$true] %s40
      %43 = dma.hbm_to_vmem [thread:$0]  %s36, 32, %s41, %s38, 128, 128, 1
      %s44 = sld [smem:[#allocation5 + $0x2]]
      %s45 = sshrl.u32 %s44, 3
      %s46 = sand.u32 %s44, 7
      %s47 = smul.u32 %s45, 16
      %s48 = sadd.s32 %s46, %s47
      %s49 = smul.addr %s48, 16
      %s50 = scalar_lea.hbm %s1, %s49
      %s51 = scalar_lea.vmem [#allocation2], 2
      %s52 = scalar_lea.sflag [#allocation3], 2
      %s54 = sshll.u32 %s51, 4
      %s55 = int_to_ptr.vmem [resolvable:$true] %s54
      %57 = dma.hbm_to_vmem [thread:$0]  %s50, 32, %s55, %s52, 128, 128, 1
      %s58 = sld [smem:[#allocation5 + $0x3]]
      %s59 = sshrl.u32 %s58, 3
      %s60 = sand.u32 %s58, 7
      %s61 = smul.u32 %s59, 16
      %s62 = sadd.s32 %s60, %s61
      %s63 = smul.addr %s62, 16
      %s64 = scalar_lea.hbm %s1, %s63
      %s65 = scalar_lea.vmem [#allocation2], 3
      %s66 = scalar_lea.sflag [#allocation3], 3
      %s68 = sshll.u32 %s65, 4
      %s69 = int_to_ptr.vmem [resolvable:$true] %s68
      %71 = dma.hbm_to_vmem [thread:$0]  %s64, 32, %s69, %s66, 128, 128, 1
      %s72 = sld [smem:[#allocation5 + $0x4]]
      %s73 = sshrl.u32 %s72, 3
      %s74 = sand.u32 %s72, 7
      %s75 = smul.u32 %s73, 16
      %s76 = sadd.s32 %s74, %s75
      %s77 = smul.addr %s76, 16
      %s78 = scalar_lea.hbm %s1, %s77
      %s79 = scalar_lea.vmem [#allocation2], 4
      %s80 = scalar_lea.sflag [#allocation3], 4
      %s82 = sshll.u32 %s79, 4
      %s83 = int_to_ptr.vmem [resolvable:$true] %s82
      %85 = dma.hbm_to_vmem [thread:$0]  %s78, 32, %s83, %s80, 128, 128, 1
      %s86 = sld [smem:[#allocation5 + $0x5]]
      %s87 = sshrl.u32 %s86, 3
      %s88 = sand.u32 %s86, 7
      %s89 = smul.u32 %s87, 16
      %s90 = sadd.s32 %s88, %s89
      %s91 = smul.addr %s90, 16
      %s92 = scalar_lea.hbm %s1, %s91
      %s93 = scalar_lea.vmem [#allocation2], 5
      %s94 = scalar_lea.sflag [#allocation3], 5
      %s96 = sshll.u32 %s93, 4
      %s97 = int_to_ptr.vmem [resolvable:$true] %s96
      %99 = dma.hbm_to_vmem [thread:$0]  %s92, 32, %s97, %s94, 128, 128, 1
      %s100 = sld [smem:[#allocation5 + $0x6]]
      %s101 = sshrl.u32 %s100, 3
      %s102 = sand.u32 %s100, 7
      %s103 = smul.u32 %s101, 16
      %s104 = sadd.s32 %s102, %s103
      %s105 = smul.addr %s104, 16
      %s106 = scalar_lea.hbm %s1, %s105
      %s107 = scalar_lea.vmem [#allocation2], 6
      %s108 = scalar_lea.sflag [#allocation3], 6
      %s110 = sshll.u32 %s107, 4
      %s111 = int_to_ptr.vmem [resolvable:$true] %s110
      %113 = dma.hbm_to_vmem [thread:$0]  %s106, 32, %s111, %s108, 128, 128, 1
      %s114 = sld [smem:[#allocation5 + $0x7]]
      %s115 = sshrl.u32 %s114, 3
      %s116 = sand.u32 %s114, 7
      %s117 = smul.u32 %s115, 16
      %s118 = sadd.s32 %s116, %s117
      %s119 = smul.addr %s118, 16
      %s120 = scalar_lea.hbm %s1, %s119
      %s121 = scalar_lea.vmem [#allocation2], 7
      %s122 = scalar_lea.sflag [#allocation3], 7
      %s124 = sshll.u32 %s121, 4
      %s125 = int_to_ptr.vmem [resolvable:$true] %s124
      %127 = dma.hbm_to_vmem [thread:$0]  %s120, 32, %s125, %s122, 128, 128, 1
      %s128 = sld [smem:[#allocation5 + $0x8]]
      %s129 = sshrl.u32 %s128, 3
      %s130 = sand.u32 %s128, 7
      %s131 = smul.u32 %s129, 16
      %s132 = sadd.s32 %s130, %s131
      %s133 = smul.addr %s132, 16
      %s134 = scalar_lea.hbm %s1, %s133
      %s135 = scalar_lea.vmem [#allocation2], 16
      %s136 = scalar_lea.sflag [#allocation3], 8
      %s138 = sshll.u32 %s135, 4
      %s139 = int_to_ptr.vmem [resolvable:$true] %s138
      %141 = dma.hbm_to_vmem [thread:$0]  %s134, 32, %s139, %s136, 128, 128, 1
      %s142 = sld [smem:[#allocation5 + $0x9]]
      %s143 = sshrl.u32 %s142, 3
      %s144 = sand.u32 %s142, 7
      %s145 = smul.u32 %s143, 16
      %s146 = sadd.s32 %s144, %s145
      %s147 = smul.addr %s146, 16
      %s148 = scalar_lea.hbm %s1, %s147
      %s149 = scalar_lea.vmem [#allocation2], 17
      %s150 = scalar_lea.sflag [#allocation3], 9
      %s152 = sshll.u32 %s149, 4
      %s153 = int_to_ptr.vmem [resolvable:$true] %s152
      %155 = dma.hbm_to_vmem [thread:$0]  %s148, 32, %s153, %s150, 128, 128, 1
      %s156 = sld [smem:[#allocation5 + $0xa]]
      %s157 = sshrl.u32 %s156, 3
      %s158 = sand.u32 %s156, 7
      %s159 = smul.u32 %s157, 16
      %s160 = sadd.s32 %s158, %s159
      %s161 = smul.addr %s160, 16
      %s162 = scalar_lea.hbm %s1, %s161
      %s163 = scalar_lea.vmem [#allocation2], 18
      %s164 = scalar_lea.sflag [#allocation3], 10
      %s166 = sshll.u32 %s163, 4
      %s167 = int_to_ptr.vmem [resolvable:$true] %s166
      %169 = dma.hbm_to_vmem [thread:$0]  %s162, 32, %s167, %s164, 128, 128, 1
      %s170 = sld [smem:[#allocation5 + $0xb]]
      %s171 = sshrl.u32 %s170, 3
      %s172 = sand.u32 %s170, 7
      %s173 = smul.u32 %s171, 16
      %s174 = sadd.s32 %s172, %s173
      %s175 = smul.addr %s174, 16
      %s176 = scalar_lea.hbm %s1, %s175
      %s177 = scalar_lea.vmem [#allocation2], 19
      %s178 = scalar_lea.sflag [#allocation3], 11
      %s180 = sshll.u32 %s177, 4
      %s181 = int_to_ptr.vmem [resolvable:$true] %s180
      %183 = dma.hbm_to_vmem [thread:$0]  %s176, 32, %s181, %s178, 128, 128, 1
      %s184 = sld [smem:[#allocation5 + $0xc]]
      %s185 = sshrl.u32 %s184, 3
      %s186 = sand.u32 %s184, 7
      %s187 = smul.u32 %s185, 16
      %s188 = sadd.s32 %s186, %s187
      %s189 = smul.addr %s188, 16
      %s190 = scalar_lea.hbm %s1, %s189
      %s191 = scalar_lea.vmem [#allocation2], 20
      %s192 = scalar_lea.sflag [#allocation3], 12
      %s194 = sshll.u32 %s191, 4
      %s195 = int_to_ptr.vmem [resolvable:$true] %s194
      %197 = dma.hbm_to_vmem [thread:$0]  %s190, 32, %s195, %s192, 128, 128, 1
      %s198 = sld [smem:[#allocation5 + $0xd]]
      %s199 = sshrl.u32 %s198, 3
      %s200 = sand.u32 %s198, 7
      %s201 = smul.u32 %s199, 16
      %s202 = sadd.s32 %s200, %s201
      %s203 = smul.addr %s202, 16
      %s204 = scalar_lea.hbm %s1, %s203
      %s205 = scalar_lea.vmem [#allocation2], 21
      %s206 = scalar_lea.sflag [#allocation3], 13
      %s208 = sshll.u32 %s205, 4
      %s209 = int_to_ptr.vmem [resolvable:$true] %s208
      %211 = dma.hbm_to_vmem [thread:$0]  %s204, 32, %s209, %s206, 128, 128, 1
      %s212 = sld [smem:[#allocation5 + $0xe]]
      %s213 = sshrl.u32 %s212, 3
      %s214 = sand.u32 %s212, 7
      %s215 = smul.u32 %s213, 16
      %s216 = sadd.s32 %s214, %s215
      %s217 = smul.addr %s216, 16
      %s218 = scalar_lea.hbm %s1, %s217
      %s219 = scalar_lea.vmem [#allocation2], 22
      %s220 = scalar_lea.sflag [#allocation3], 14
      %s222 = sshll.u32 %s219, 4
      %s223 = int_to_ptr.vmem [resolvable:$true] %s222
      %225 = dma.hbm_to_vmem [thread:$0]  %s218, 32, %s223, %s220, 128, 128, 1
      %s226 = sld [smem:[#allocation5 + $0xf]]
      %s227 = sshrl.u32 %s226, 3
      %s228 = sand.u32 %s226, 7
      %s229 = smul.u32 %s227, 16
      %s230 = sadd.s32 %s228, %s229
      %s231 = smul.addr %s230, 16
      %s232 = scalar_lea.hbm %s1, %s231
      %s233 = scalar_lea.vmem [#allocation2], 23
      %s234 = scalar_lea.sflag [#allocation3], 15
      %s236 = sshll.u32 %s233, 4
      %s237 = int_to_ptr.vmem [resolvable:$true] %s236
      %239 = dma.hbm_to_vmem [thread:$0]  %s232, 32, %s237, %s234, 128, 128, 1
    $region5: #{tpu_custom_call.1} parent=1 // pred_fallthru
      _
    %s240 = sadd.s32 0, 1
    %p241 = scmp.lt.s32.totalorder %s240, 1
    // Predicated region
    $region6: #{tpu_custom_call.1} parent=1 // pred_check
      %p242 = pneg %p241
    $region7: #{tpu_custom_call.1} parent=1 // pred_check_branch
      %244 = sbr.rel (%p242) target = $region9
    $region8: #{tpu_custom_call.1} parent=1 // pred_region
      %s245 = smul.u32 %s240, 16
      %s246 = sld [smem:[#allocation5 + %s245]]
      %s247 = sshrl.u32 %s246, 3
      %s248 = sand.u32 %s246, 7
      %s249 = smul.u32 %s247, 16
      %s250 = sadd.s32 %s248, %s249
      %s251 = smul.addr %s250, 16
      %s252 = scalar_lea.hbm %s1, %s251
      %s253 = smul.u32 %s13, 32
      %s254 = scalar_lea.vmem [#allocation2], %s253
      %s255 = smul.u32 %s13, 16
      %s256 = scalar_lea.sflag [#allocation3], %s255
      %s258 = sshll.u32 %s254, 4
      %s259 = int_to_ptr.vmem [resolvable:$true] %s258
      %261 = dma.hbm_to_vmem [thread:$0]  %s252, 32, %s259, %s256, 128, 128, 1
      %s262 = sadd.s32 %s245, 1
      %s263 = sld [smem:[#allocation5 + %s262]]
      %s264 = sshrl.u32 %s263, 3
      %s265 = sand.u32 %s263, 7
      %s266 = smul.u32 %s264, 16
      %s267 = sadd.s32 %s265, %s266
      %s268 = smul.addr %s267, 16
      %s269 = scalar_lea.hbm %s1, %s268
      %s270 = sadd.s32 1, %s253
      %s271 = scalar_lea.vmem [#allocation2], %s270
      %s272 = sadd.s32 1, %s255
      %s273 = scalar_lea.sflag [#allocation3], %s272
      %s275 = sshll.u32 %s271, 4
      %s276 = int_to_ptr.vmem [resolvable:$true] %s275
      %278 = dma.hbm_to_vmem [thread:$0]  %s269, 32, %s276, %s273, 128, 128, 1
      %s279 = sadd.s32 %s245, 2
      %s280 = sld [smem:[#allocation5 + %s279]]
      %s281 = sshrl.u32 %s280, 3
      %s282 = sand.u32 %s280, 7
      %s283 = smul.u32 %s281, 16
      %s284 = sadd.s32 %s282, %s283
      %s285 = smul.addr %s284, 16
      %s286 = scalar_lea.hbm %s1, %s285
      %s287 = sadd.s32 2, %s253
      %s288 = scalar_lea.vmem [#allocation2], %s287
      %s289 = sadd.s32 2, %s255
      %s290 = scalar_lea.sflag [#allocation3], %s289
      %s292 = sshll.u32 %s288, 4
      %s293 = int_to_ptr.vmem [resolvable:$true] %s292
      %295 = dma.hbm_to_vmem [thread:$0]  %s286, 32, %s293, %s290, 128, 128, 1
      %s296 = sadd.s32 %s245, 3
      %s297 = sld [smem:[#allocation5 + %s296]]
      %s298 = sshrl.u32 %s297, 3
      %s299 = sand.u32 %s297, 7
      %s300 = smul.u32 %s298, 16
      %s301 = sadd.s32 %s299, %s300
      %s302 = smul.addr %s301, 16
      %s303 = scalar_lea.hbm %s1, %s302
      %s304 = sadd.s32 3, %s253
      %s305 = scalar_lea.vmem [#allocation2], %s304
      %s306 = sadd.s32 3, %s255
      %s307 = scalar_lea.sflag [#allocation3], %s306
      %s309 = sshll.u32 %s305, 4
      %s310 = int_to_ptr.vmem [resolvable:$true] %s309
      %312 = dma.hbm_to_vmem [thread:$0]  %s303, 32, %s310, %s307, 128, 128, 1
      %s313 = sadd.s32 %s245, 4
      %s314 = sld [smem:[#allocation5 + %s313]]
      %s315 = sshrl.u32 %s314, 3
      %s316 = sand.u32 %s314, 7
      %s317 = smul.u32 %s315, 16
      %s318 = sadd.s32 %s316, %s317
      %s319 = smul.addr %s318, 16
      %s320 = scalar_lea.hbm %s1, %s319
      %s321 = sadd.s32 4, %s253
      %s322 = scalar_lea.vmem [#allocation2], %s321
      %s323 = sadd.s32 4, %s255
      %s324 = scalar_lea.sflag [#allocation3], %s323
      %s326 = sshll.u32 %s322, 4
      %s327 = int_to_ptr.vmem [resolvable:$true] %s326
      %329 = dma.hbm_to_vmem [thread:$0]  %s320, 32, %s327, %s324, 128, 128, 1
      %s330 = sadd.s32 %s245, 5
      %s331 = sld [smem:[#allocation5 + %s330]]
      %s332 = sshrl.u32 %s331, 3
      %s333 = sand.u32 %s331, 7
      %s334 = smul.u32 %s332, 16
      %s335 = sadd.s32 %s333, %s334
      %s336 = smul.addr %s335, 16
      %s337 = scalar_lea.hbm %s1, %s336
      %s338 = sadd.s32 5, %s253
      %s339 = scalar_lea.vmem [#allocation2], %s338
      %s340 = sadd.s32 5, %s255
      %s341 = scalar_lea.sflag [#allocation3], %s340
      %s343 = sshll.u32 %s339, 4
      %s344 = int_to_ptr.vmem [resolvable:$true] %s343
      %346 = dma.hbm_to_vmem [thread:$0]  %s337, 32, %s344, %s341, 128, 128, 1
      %s347 = sadd.s32 %s245, 6
      %s348 = sld [smem:[#allocation5 + %s347]]
      %s349 = sshrl.u32 %s348, 3
      %s350 = sand.u32 %s348, 7
      %s351 = smul.u32 %s349, 16
      %s352 = sadd.s32 %s350, %s351
      %s353 = smul.addr %s352, 16
      %s354 = scalar_lea.hbm %s1, %s353
      %s355 = sadd.s32 6, %s253
      %s356 = scalar_lea.vmem [#allocation2], %s355
      %s357 = sadd.s32 6, %s255
      %s358 = scalar_lea.sflag [#allocation3], %s357
      %s360 = sshll.u32 %s356, 4
      %s361 = int_to_ptr.vmem [resolvable:$true] %s360
      %363 = dma.hbm_to_vmem [thread:$0]  %s354, 32, %s361, %s358, 128, 128, 1
      %s364 = sadd.s32 %s245, 7
      %s365 = sld [smem:[#allocation5 + %s364]]
      %s366 = sshrl.u32 %s365, 3
      %s367 = sand.u32 %s365, 7
      %s368 = smul.u32 %s366, 16
      %s369 = sadd.s32 %s367, %s368
      %s370 = smul.addr %s369, 16
      %s371 = scalar_lea.hbm %s1, %s370
      %s372 = sadd.s32 7, %s253
      %s373 = scalar_lea.vmem [#allocation2], %s372
      %s374 = sadd.s32 7, %s255
      %s375 = scalar_lea.sflag [#allocation3], %s374
      %s377 = sshll.u32 %s373, 4
      %s378 = int_to_ptr.vmem [resolvable:$true] %s377
      %380 = dma.hbm_to_vmem [thread:$0]  %s371, 32, %s378, %s375, 128, 128, 1
      %s381 = sadd.s32 %s245, 8
      %s382 = sld [smem:[#allocation5 + %s381]]
      %s383 = sshrl.u32 %s382, 3
      %s384 = sand.u32 %s382, 7
      %s385 = smul.u32 %s383, 16
      %s386 = sadd.s32 %s384, %s385
      %s387 = smul.addr %s386, 16
      %s388 = scalar_lea.hbm %s1, %s387
      %s389 = sadd.s32 16, %s253
      %s390 = scalar_lea.vmem [#allocation2], %s389
      %s391 = sadd.s32 8, %s255
      %s392 = scalar_lea.sflag [#allocation3], %s391
      %s394 = sshll.u32 %s390, 4
      %s395 = int_to_ptr.vmem [resolvable:$true] %s394
      %397 = dma.hbm_to_vmem [thread:$0]  %s388, 32, %s395, %s392, 128, 128, 1
      %s398 = sadd.s32 %s245, 9
      %s399 = sld [smem:[#allocation5 + %s398]]
      %s400 = sshrl.u32 %s399, 3
      %s401 = sand.u32 %s399, 7
      %s402 = smul.u32 %s400, 16
      %s403 = sadd.s32 %s401, %s402
      %s404 = smul.addr %s403, 16
      %s405 = scalar_lea.hbm %s1, %s404
      %s406 = sadd.s32 17, %s253
      %s407 = scalar_lea.vmem [#allocation2], %s406
      %s408 = sadd.s32 9, %s255
      %s409 = scalar_lea.sflag [#allocation3], %s408
      %s411 = sshll.u32 %s407, 4
      %s412 = int_to_ptr.vmem [resolvable:$true] %s411
      %414 = dma.hbm_to_vmem [thread:$0]  %s405, 32, %s412, %s409, 128, 128, 1
      %s415 = sadd.s32 %s245, 10
      %s416 = sld [smem:[#allocation5 + %s415]]
      %s417 = sshrl.u32 %s416, 3
      %s418 = sand.u32 %s416, 7
      %s419 = smul.u32 %s417, 16
      %s420 = sadd.s32 %s418, %s419
      %s421 = smul.addr %s420, 16
      %s422 = scalar_lea.hbm %s1, %s421
      %s423 = sadd.s32 18, %s253
      %s424 = scalar_lea.vmem [#allocation2], %s423
      %s425 = sadd.s32 10, %s255
      %s426 = scalar_lea.sflag [#allocation3], %s425
      %s428 = sshll.u32 %s424, 4
      %s429 = int_to_ptr.vmem [resolvable:$true] %s428
      %431 = dma.hbm_to_vmem [thread:$0]  %s422, 32, %s429, %s426, 128, 128, 1
      %s432 = sadd.s32 %s245, 11
      %s433 = sld [smem:[#allocation5 + %s432]]
      %s434 = sshrl.u32 %s433, 3
      %s435 = sand.u32 %s433, 7
      %s436 = smul.u32 %s434, 16
      %s437 = sadd.s32 %s435, %s436
      %s438 = smul.addr %s437, 16
      %s439 = scalar_lea.hbm %s1, %s438
      %s440 = sadd.s32 19, %s253
      %s441 = scalar_lea.vmem [#allocation2], %s440
      %s442 = sadd.s32 11, %s255
      %s443 = scalar_lea.sflag [#allocation3], %s442
      %s445 = sshll.u32 %s441, 4
      %s446 = int_to_ptr.vmem [resolvable:$true] %s445
      %448 = dma.hbm_to_vmem [thread:$0]  %s439, 32, %s446, %s443, 128, 128, 1
      %s449 = sadd.s32 %s245, 12
      %s450 = sld [smem:[#allocation5 + %s449]]
      %s451 = sshrl.u32 %s450, 3
      %s452 = sand.u32 %s450, 7
      %s453 = smul.u32 %s451, 16
      %s454 = sadd.s32 %s452, %s453
      %s455 = smul.addr %s454, 16
      %s456 = scalar_lea.hbm %s1, %s455
      %s457 = sadd.s32 20, %s253
      %s458 = scalar_lea.vmem [#allocation2], %s457
      %s459 = sadd.s32 12, %s255
      %s460 = scalar_lea.sflag [#allocation3], %s459
      %s462 = sshll.u32 %s458, 4
      %s463 = int_to_ptr.vmem [resolvable:$true] %s462
      %465 = dma.hbm_to_vmem [thread:$0]  %s456, 32, %s463, %s460, 128, 128, 1
      %s466 = sadd.s32 %s245, 13
      %s467 = sld [smem:[#allocation5 + %s466]]
      %s468 = sshrl.u32 %s467, 3
      %s469 = sand.u32 %s467, 7
      %s470 = smul.u32 %s468, 16
      %s471 = sadd.s32 %s469, %s470
      %s472 = smul.addr %s471, 16
      %s473 = scalar_lea.hbm %s1, %s472
      %s474 = sadd.s32 21, %s253
      %s475 = scalar_lea.vmem [#allocation2], %s474
      %s476 = sadd.s32 13, %s255
      %s477 = scalar_lea.sflag [#allocation3], %s476
      %s479 = sshll.u32 %s475, 4
      %s480 = int_to_ptr.vmem [resolvable:$true] %s479
      %482 = dma.hbm_to_vmem [thread:$0]  %s473, 32, %s480, %s477, 128, 128, 1
      %s483 = sadd.s32 %s245, 14
      %s484 = sld [smem:[#allocation5 + %s483]]
      %s485 = sshrl.u32 %s484, 3
      %s486 = sand.u32 %s484, 7
      %s487 = smul.u32 %s485, 16
      %s488 = sadd.s32 %s486, %s487
      %s489 = smul.addr %s488, 16
      %s490 = scalar_lea.hbm %s1, %s489
      %s491 = sadd.s32 22, %s253
      %s492 = scalar_lea.vmem [#allocation2], %s491
      %s493 = sadd.s32 14, %s255
      %s494 = scalar_lea.sflag [#allocation3], %s493
      %s496 = sshll.u32 %s492, 4
      %s497 = int_to_ptr.vmem [resolvable:$true] %s496
      %499 = dma.hbm_to_vmem [thread:$0]  %s490, 32, %s497, %s494, 128, 128, 1
      %s500 = sadd.s32 %s245, 15
      %s501 = sld [smem:[#allocation5 + %s500]]
      %s502 = sshrl.u32 %s501, 3
      %s503 = sand.u32 %s501, 7
      %s504 = smul.u32 %s502, 16
      %s505 = sadd.s32 %s503, %s504
      %s506 = smul.addr %s505, 16
      %s507 = scalar_lea.hbm %s1, %s506
      %s508 = sadd.s32 23, %s253
      %s509 = scalar_lea.vmem [#allocation2], %s508
      %s510 = sadd.s32 15, %s255
      %s511 = scalar_lea.sflag [#allocation3], %s510
      %s513 = sshll.u32 %s509, 4
      %s514 = int_to_ptr.vmem [resolvable:$true] %s513
      %516 = dma.hbm_to_vmem [thread:$0]  %s507, 32, %s514, %s511, 128, 128, 1
    $region9: #{tpu_custom_call.1} parent=1 // pred_fallthru
      _
    %s517 = smul.u32 0, 16
    %s518 = sld [smem:[#allocation5 + %s517]]
    %s519 = smul.u32 %s12, 16
    %s520 = scalar_lea.sflag [#allocation3], %s519
    %s521 = smul.u32 1, 2
    %s522 = sshll.u32 %s521, 4
    %523 = dma.done %s520, %s522
    %s524 = sadd.s32 %s517, 1
    %s525 = sld [smem:[#allocation5 + %s524]]
    %s526 = sadd.s32 1, %s519
    %s527 = scalar_lea.sflag [#allocation3], %s526
    %s528 = sshll.u32 %s521, 4
    %529 = dma.done %s527, %s528
    %s530 = sadd.s32 %s517, 2
    %s531 = sld [smem:[#allocation5 + %s530]]
    %s532 = sadd.s32 2, %s519
    %s533 = scalar_lea.sflag [#allocation3], %s532
    %s534 = sshll.u32 %s521, 4
    %535 = dma.done %s533, %s534
    %s536 = sadd.s32 %s517, 3
    %s537 = sld [smem:[#allocation5 + %s536]]
    %s538 = sadd.s32 3, %s519
    %s539 = scalar_lea.sflag [#allocation3], %s538
    %s540 = sshll.u32 %s521, 4
    %541 = dma.done %s539, %s540
    %s542 = sadd.s32 %s517, 4
    %s543 = sld [smem:[#allocation5 + %s542]]
    %s544 = sadd.s32 4, %s519
    %s545 = scalar_lea.sflag [#allocation3], %s544
    %s546 = sshll.u32 %s521, 4
    %547 = dma.done %s545, %s546
    %s548 = sadd.s32 %s517, 5
    %s549 = sld [smem:[#allocation5 + %s548]]
    %s550 = sadd.s32 5, %s519
    %s551 = scalar_lea.sflag [#allocation3], %s550
    %s552 = sshll.u32 %s521, 4
    %553 = dma.done %s551, %s552
    %s554 = sadd.s32 %s517, 6
    %s555 = sld [smem:[#allocation5 + %s554]]
    %s556 = sadd.s32 6, %s519
    %s557 = scalar_lea.sflag [#allocation3], %s556
    %s558 = sshll.u32 %s521, 4
    %559 = dma.done %s557, %s558
    %s560 = sadd.s32 %s517, 7
    %s561 = sld [smem:[#allocation5 + %s560]]
    %s562 = sadd.s32 7, %s519
    %s563 = scalar_lea.sflag [#allocation3], %s562
    %s564 = sshll.u32 %s521, 4
    %565 = dma.done %s563, %s564
    %s566 = sadd.s32 %s517, 8
    %s567 = sld [smem:[#allocation5 + %s566]]
    %s568 = sadd.s32 8, %s519
    %s569 = scalar_lea.sflag [#allocation3], %s568
    %s570 = sshll.u32 %s521, 4
    %571 = dma.done %s569, %s570
    %s572 = sadd.s32 %s517, 9
    %s573 = sld [smem:[#allocation5 + %s572]]
    %s574 = sadd.s32 9, %s519
    %s575 = scalar_lea.sflag [#allocation3], %s574
    %s576 = sshll.u32 %s521, 4
    %577 = dma.done %s575, %s576
    %s578 = sadd.s32 %s517, 10
    %s579 = sld [smem:[#allocation5 + %s578]]
    %s580 = sadd.s32 10, %s519
    %s581 = scalar_lea.sflag [#allocation3], %s580
    %s582 = sshll.u32 %s521, 4
    %583 = dma.done %s581, %s582
    %s584 = sadd.s32 %s517, 11
    %s585 = sld [smem:[#allocation5 + %s584]]
    %s586 = sadd.s32 11, %s519
    %s587 = scalar_lea.sflag [#allocation3], %s586
    %s588 = sshll.u32 %s521, 4
    %589 = dma.done %s587, %s588
    %s590 = sadd.s32 %s517, 12
    %s591 = sld [smem:[#allocation5 + %s590]]
    %s592 = sadd.s32 12, %s519
    %s593 = scalar_lea.sflag [#allocation3], %s592
    %s594 = sshll.u32 %s521, 4
    %595 = dma.done %s593, %s594
    %s596 = sadd.s32 %s517, 13
    %s597 = sld [smem:[#allocation5 + %s596]]
    %s598 = sadd.s32 13, %s519
    %s599 = scalar_lea.sflag [#allocation3], %s598
    %s600 = sshll.u32 %s521, 4
    %601 = dma.done %s599, %s600
    %s602 = sadd.s32 %s517, 14
    %s603 = sld [smem:[#allocation5 + %s602]]
    %s604 = sadd.s32 14, %s519
    %s605 = scalar_lea.sflag [#allocation3], %s604
    %s606 = sshll.u32 %s521, 4
    %607 = dma.done %s605, %s606
    %s608 = sadd.s32 %s517, 15
    %s609 = sld [smem:[#allocation5 + %s608]]
    %s610 = sadd.s32 15, %s519
    %s611 = scalar_lea.sflag [#allocation3], %s610
    %s612 = sshll.u32 %s521, 4
    %613 = dma.done %s611, %s612
    %s614 = smul.u32 %s12, 4
    %s615 = smul.addr %s614, 8
    %s616 = scalar_lea.vmem [#allocation2], %s615
    %v617 = vld [vmem:[%s616] sm:$0xff]
    %v618 = vld [vmem:[%s616 + $0x8] sm:$0xff]
    %v619 = vld [vmem:[%s616 + $0x10] sm:$0xff]
    %v620 = vld [vmem:[%s616 + $0x18] sm:$0xff]
    %621 = vst [vmem:[#allocation6] sm:$0xff] %v617
    %622 = vst [vmem:[#allocation6 + $0x8] sm:$0xff] %v618
    %623 = vst [vmem:[#allocation6 + $0x10] sm:$0xff] %v619
    %624 = vst [vmem:[#allocation6 + $0x18] sm:$0xff] %v620
    // Predicated region
    $region10: #{tpu_custom_call.1} parent=1 // pred_check
      _
    $region11: #{tpu_custom_call.1} parent=1 // pred_check_branch
      %626 = sbr.rel (0) target = $region13
    $region12: #{tpu_custom_call.1} parent=1 // pred_region
      %s628 = ssub.s32 512, 512
      %629 = vsyncadd [#allocation7], %s628
      %s630 = sshll.u32 [#allocation6], 4
      %s631 = int_to_ptr.vmem [resolvable:$true] %s630
      %636 = dma.vmem_to_hbm [thread:$0]  %s631, 512, %s2, [#allocation7], 256, 256, 16
    $region13: #{tpu_custom_call.1} parent=1 // pred_fallthru
      _
    // Predicated region
    $region14: #{tpu_custom_call.1} parent=1 // pred_check
      _
    $region15: #{tpu_custom_call.1} parent=1 // pred_check_branch
      %638 = sbr.rel (0) target = $region17
    $region16: #{tpu_custom_call.1} parent=1 // pred_region
      %639 = dma.done [#allocation7], 512
    $region17: #{tpu_custom_call.1} parent=1 // pred_fallthru
      _
    %640 = vsyncpa [#allocation7], 1
  %641 = vsyncmov [#allocation3]
  %s642 = vpop.sfrf %641
  %p643 = scmp.eq.s32.totalorder %s642, 0
  %p644 = pneg %p643
  %646 = shalt.err (%p644)
  %s647 = scalar_lea.sflag [#allocation3], 1
  %648 = vsyncmov %s647
  %s649 = vpop.sfrf %648
  %p650 = scmp.eq.s32.totalorder %s649, 0
  %p651 = pneg %p650
  %653 = shalt.err (%p651)
  %s654 = scalar_lea.sflag [#allocation3], 2
  %655 = vsyncmov %s654
  %s656 = vpop.sfrf %655
  %p657 = scmp.eq.s32.totalorder %s656, 0
  %p658 = pneg %p657
  %660 = shalt.err (%p658)
  %s661 = scalar_lea.sflag [#allocation3], 3
  %662 = vsyncmov %s661
  %s663 = vpop.sfrf %662
  %p664 = scmp.eq.s32.totalorder %s663, 0
  %p665 = pneg %p664
  %667 = shalt.err (%p665)
  %s668 = scalar_lea.sflag [#allocation3], 4
  %669 = vsyncmov %s668
  %s670 = vpop.sfrf %669
  %p671 = scmp.eq.s32.totalorder %s670, 0
  %p672 = pneg %p671
  %674 = shalt.err (%p672)
  %s675 = scalar_lea.sflag [#allocation3], 5
  %676 = vsyncmov %s675
  %s677 = vpop.sfrf %676
  %p678 = scmp.eq.s32.totalorder %s677, 0
  %p679 = pneg %p678
  %681 = shalt.err (%p679)
  %s682 = scalar_lea.sflag [#allocation3], 6
  %683 = vsyncmov %s682
  %s684 = vpop.sfrf %683
  %p685 = scmp.eq.s32.totalorder %s684, 0
  %p686 = pneg %p685
  %688 = shalt.err (%p686)
  %s689 = scalar_lea.sflag [#allocation3], 7
  %690 = vsyncmov %s689
  %s691 = vpop.sfrf %690
  %p692 = scmp.eq.s32.totalorder %s691, 0
  %p693 = pneg %p692
  %695 = shalt.err (%p693)
  %s696 = scalar_lea.sflag [#allocation3], 8
  %697 = vsyncmov %s696
  %s698 = vpop.sfrf %697
  %p699 = scmp.eq.s32.totalorder %s698, 0
  %p700 = pneg %p699
  %702 = shalt.err (%p700)
  %s703 = scalar_lea.sflag [#allocation3], 9
  %704 = vsyncmov %s703
  %s705 = vpop.sfrf %704
  %p706 = scmp.eq.s32.totalorder %s705, 0
  %p707 = pneg %p706
  %709 = shalt.err (%p707)
  %s710 = scalar_lea.sflag [#allocation3], 10
  %711 = vsyncmov %s710
  %s712 = vpop.sfrf %711
  %p713 = scmp.eq.s32.totalorder %s712, 0
  %p714 = pneg %p713
  %716 = shalt.err (%p714)
  %s717 = scalar_lea.sflag [#allocation3], 11
  %718 = vsyncmov %s717
  %s719 = vpop.sfrf %718
  %p720 = scmp.eq.s32.totalorder %s719, 0
  %p721 = pneg %p720
  %723 = shalt.err (%p721)
  %s724 = scalar_lea.sflag [#allocation3], 12
  %725 = vsyncmov %s724
  %s726 = vpop.sfrf %725
  %p727 = scmp.eq.s32.totalorder %s726, 0
  %p728 = pneg %p727
  %730 = shalt.err (%p728)
  %s731 = scalar_lea.sflag [#allocation3], 13
  %732 = vsyncmov %s731
  %s733 = vpop.sfrf %732
  %p734 = scmp.eq.s32.totalorder %s733, 0
  %p735 = pneg %p734
  %737 = shalt.err (%p735)
  %s738 = scalar_lea.sflag [#allocation3], 14
  %739 = vsyncmov %s738
  %s740 = vpop.sfrf %739
  %p741 = scmp.eq.s32.totalorder %s740, 0
  %p742 = pneg %p741
  %744 = shalt.err (%p742)
  %s745 = scalar_lea.sflag [#allocation3], 15
  %746 = vsyncmov %s745
  %s747 = vpop.sfrf %746
  %p748 = scmp.eq.s32.totalorder %s747, 0
  %p749 = pneg %p748
  %751 = shalt.err (%p749)
  %s752 = scalar_lea.sflag [#allocation3], 16
  %753 = vsyncmov %s752
  %s754 = vpop.sfrf %753
  %p755 = scmp.eq.s32.totalorder %s754, 0
  %p756 = pneg %p755
  %758 = shalt.err (%p756)
  %s759 = scalar_lea.sflag [#allocation3], 17
  %760 = vsyncmov %s759
  %s761 = vpop.sfrf %760
  %p762 = scmp.eq.s32.totalorder %s761, 0
  %p763 = pneg %p762
  %765 = shalt.err (%p763)
  %s766 = scalar_lea.sflag [#allocation3], 18
  %767 = vsyncmov %s766
  %s768 = vpop.sfrf %767
  %p769 = scmp.eq.s32.totalorder %s768, 0
  %p770 = pneg %p769
  %772 = shalt.err (%p770)
  %s773 = scalar_lea.sflag [#allocation3], 19
  %774 = vsyncmov %s773
  %s775 = vpop.sfrf %774
  %p776 = scmp.eq.s32.totalorder %s775, 0
  %p777 = pneg %p776
  %779 = shalt.err (%p777)
  %s780 = scalar_lea.sflag [#allocation3], 20
  %781 = vsyncmov %s780
  %s782 = vpop.sfrf %781
  %p783 = scmp.eq.s32.totalorder %s782, 0
  %p784 = pneg %p783
  %786 = shalt.err (%p784)
  %s787 = scalar_lea.sflag [#allocation3], 21
  %788 = vsyncmov %s787
  %s789 = vpop.sfrf %788
  %p790 = scmp.eq.s32.totalorder %s789, 0
  %p791 = pneg %p790
  %793 = shalt.err (%p791)
  %s794 = scalar_lea.sflag [#allocation3], 22
  %795 = vsyncmov %s794
  %s796 = vpop.sfrf %795
  %p797 = scmp.eq.s32.totalorder %s796, 0
  %p798 = pneg %p797
  %800 = shalt.err (%p798)
  %s801 = scalar_lea.sflag [#allocation3], 23
  %802 = vsyncmov %s801
  %s803 = vpop.sfrf %802
  %p804 = scmp.eq.s32.totalorder %s803, 0
  %p805 = pneg %p804
  %807 = shalt.err (%p805)
  %s808 = scalar_lea.sflag [#allocation3], 24
  %809 = vsyncmov %s808
  %s810 = vpop.sfrf %809
  %p811 = scmp.eq.s32.totalorder %s810, 0
  %p812 = pneg %p811
  %814 = shalt.err (%p812)
  %s815 = scalar_lea.sflag [#allocation3], 25
  %816 = vsyncmov %s815
  %s817 = vpop.sfrf %816
  %p818 = scmp.eq.s32.totalorder %s817, 0
  %p819 = pneg %p818
  %821 = shalt.err (%p819)
  %s822 = scalar_lea.sflag [#allocation3], 26
  %823 = vsyncmov %s822
  %s824 = vpop.sfrf %823
  %p825 = scmp.eq.s32.totalorder %s824, 0
  %p826 = pneg %p825
  %828 = shalt.err (%p826)
  %s829 = scalar_lea.sflag [#allocation3], 27
  %830 = vsyncmov %s829
  %s831 = vpop.sfrf %830
  %p832 = scmp.eq.s32.totalorder %s831, 0
  %p833 = pneg %p832
  %835 = shalt.err (%p833)
  %s836 = scalar_lea.sflag [#allocation3], 28
  %837 = vsyncmov %s836
  %s838 = vpop.sfrf %837
  %p839 = scmp.eq.s32.totalorder %s838, 0
  %p840 = pneg %p839
  %842 = shalt.err (%p840)
  %s843 = scalar_lea.sflag [#allocation3], 29
  %844 = vsyncmov %s843
  %s845 = vpop.sfrf %844
  %p846 = scmp.eq.s32.totalorder %s845, 0
  %p847 = pneg %p846
  %849 = shalt.err (%p847)
  %s850 = scalar_lea.sflag [#allocation3], 30
  %851 = vsyncmov %s850
  %s852 = vpop.sfrf %851
  %p853 = scmp.eq.s32.totalorder %s852, 0
  %p854 = pneg %p853
  %856 = shalt.err (%p854)
  %s857 = scalar_lea.sflag [#allocation3], 31
  %858 = vsyncmov %s857
  %s859 = vpop.sfrf %858
  %p860 = scmp.eq.s32.totalorder %s859, 0
  %p861 = pneg %p860
  %863 = shalt.err (%p861)

</llo_original>
